<compile_context>
chip_gen: v5e
topology: v5e:2x2
jax: 0.10.0
libtpu: 0.0.40
codegen_flags: <defaults>
</compile_context>

<pallas_src>
import functools

import jax
import jax.numpy as jnp
from jax.experimental import pallas as pl
from jax.experimental.pallas import tpu as pltpu


# ---------------------------------------------------------------------------
# Fused kernel: 3x3 conv (taps built in-kernel) + bias + ReLU, then the
# Linear contracted per conv channel against a Cout-block-streamed weight,
# accumulating into the resident (B, N) output block.
# ---------------------------------------------------------------------------
def _epsilon_c_kernel(xpad_ref, cw_ref, cb_ref, lw_ref, lb_ref, o_ref, act_scr,
                      *, W, lpad):
    # xpad_ref: (B, Cin, PADW)   flat-HW input, zero padded by `lpad` on the left
    # cw_ref  : (Cout, 9*Cin)    conv weight, minor axis ordered (kh, kw, ci)
    # cb_ref  : (Cout, 1)        conv bias
    # lw_ref  : (CB, HW, N)      linear weight block for channels [k*CB, (k+1)*CB)
    # lb_ref  : (1, N)           linear bias
    # o_ref   : (B, N)           resident accumulator / output
    # act_scr : (NB, B, CB, HW)  conv activations, written once at step 0
    k = pl.program_id(0)
    NB, B, CB, HW = act_scr.shape
    N = lw_ref.shape[-1]
    Cout = cb_ref.shape[0]
    Cin = xpad_ref.shape[1]

    @pl.when(k == 0)
    def _conv_and_init():
        xp = xpad_ref[...]                                   # (B, Cin, PADW), ~4 KB
        cw = cw_ref[...]                                     # (Cout, 9*Cin)
        # Column-validity masks for the shifted taps (rows are handled by the zero pad).
        col = jax.lax.broadcasted_iota(jnp.int32, (Cin, HW), 1) % W
        mask_l = col >= 1            # tap kw == 0  (dj = -1)
        mask_r = col <= W - 2        # tap kw == 2  (dj = +1)
        for b in range(B):           # B is tiny and static
            acc = jnp.zeros((Cout, HW), jnp.float32)
            for t in range(9):
                kh, kw = divmod(t, 3)
                s = (kh - 1) * W + (kw - 1)
                tap = xp[b, :, lpad + s: lpad + s + HW]       # (Cin, HW) static slice
                if kw == 0:
                    tap = jnp.where(mask_l, tap, 0.0)
                elif kw == 2:
                    tap = jnp.where(mask_r, tap, 0.0)
                w_t = cw[:, t * Cin:(t + 1) * Cin]            # (Cout, Cin)
                acc = acc + jnp.dot(w_t, tap,
                                    preferred_element_type=jnp.float32)
            act_b = jnp.maximum(acc + cb_ref[...], 0.0)       # (Cout, HW)
            for j in range(NB):                               # stash per Cout-block
                act_scr[j, b] = act_b[j * CB:(j + 1) * CB, :]
        # Fold the linear bias into the accumulator init (saves a later RMW).
        o_ref[...] = jnp.broadcast_to(lb_ref[...], (B, N))

    # Linear partial for channels [k*CB, (k+1)*CB): plain (B,HW)x(HW,N) dots.
    act_blk = act_scr[k]                                      # (B, CB, HW)
    acc = o_ref[...]
    for c in range(CB):
        acc = acc + jnp.dot(act_blk[:, c, :], lw_ref[c],
                            preferred_element_type=jnp.float32)
    o_ref[...] = acc

    @pl.when(k == pl.num_programs(0) - 1)
    def _finalize():
        o_ref[...] = jnp.maximum(o_ref[...], 0.0)


# ---------------------------------------------------------------------------
# Parameter setup: all layout prep (reshape / permute of the static weights)
# happens once here — nothing is transposed at forward time.
# ---------------------------------------------------------------------------
def init_params(key, n_features=4, input_shape=(10, 10),
                embeddings_size=128, subchannels=64):
    H, W = input_shape
    k1, k2, k3, k4 = jax.random.split(key, 4)
    conv_w = 0.05 * jax.random.normal(k1, (subchannels, n_features, 3, 3), jnp.float32)
    conv_b = 0.05 * jax.random.normal(k2, (subchannels,), jnp.float32)
    lin_in = subchannels * H * W
    lin_w = 0.02 * jax.random.normal(k3, (embeddings_size, lin_in), jnp.float32)
    lin_b = 0.02 * jax.random.normal(k4, (embeddings_size,), jnp.float32)

    # One-time init-layout prep (free at forward time):
    #  conv weight as (Cout, 9*Cin) with minor axis ordered (kh, kw, ci)
    conv_w2d = jnp.transpose(conv_w, (0, 2, 3, 1)).reshape(subchannels, 9 * n_features)
    conv_b2 = conv_b.reshape(subchannels, 1)
    #  linear weight as (Cout, HW, N): lin_w3[co, p, n] == lin_w[n, co*HW + p]
    lin_w3 = jnp.transpose(lin_w.reshape(embeddings_size, subchannels, H * W), (1, 2, 0))
    lin_b2 = lin_b.reshape(1, embeddings_size)
    return dict(conv_w=conv_w, conv_b=conv_b, lin_w=lin_w, lin_b=lin_b,
                conv_w2d=conv_w2d, conv_b2=conv_b2, lin_w3=lin_w3, lin_b2=lin_b2)


# ---------------------------------------------------------------------------
# Forward: one tiny reshape+pad fusion, then a single fused pallas_call.
# ---------------------------------------------------------------------------
@jax.jit
def epsilon_c_forward(params, state):
    """state: (B, Cin, H, W) NCHW float32 -> (B, embeddings_size)."""
    B, Cin, H, W = state.shape
    HW = H * W
    Cout, HW_w, N = params["lin_w3"].shape
    assert HW_w == HW

    # Flat-HW view padded so every 3x3 tap is a static in-bounds lane slice.
    lpad = W + 1
    padw = ((HW + 2 * lpad + 127) // 128) * 128
    xpad = jnp.pad(state.reshape(B, Cin, HW),
                   ((0, 0), (0, 0), (lpad, padw - HW - lpad)))

    CB = 16 if Cout % 16 == 0 else Cout          # channels per weight-stream step
    NB = Cout // CB

    kernel = functools.partial(_epsilon_c_kernel, W=W, lpad=lpad)
    return pl.pallas_call(
        kernel,
        out_shape=jax.ShapeDtypeStruct((B, N), jnp.float32),
        grid_spec=pltpu.PrefetchScalarGridSpec(
            num_scalar_prefetch=0,
            grid=(NB,),
            in_specs=[
                pl.BlockSpec((B, Cin, padw), lambda k: (0, 0, 0)),
                pl.BlockSpec((Cout, 9 * Cin), lambda k: (0, 0)),
                pl.BlockSpec((Cout, 1), lambda k: (0, 0)),
                pl.BlockSpec((CB, HW, N), lambda k: (k, 0, 0)),   # streamed weight
                pl.BlockSpec((1, N), lambda k: (0, 0)),
            ],
            out_specs=pl.BlockSpec((B, N), lambda k: (0, 0)),      # resident accumulator
            scratch_shapes=[pltpu.VMEM((NB, B, CB, HW), jnp.float32)],
        ),
        compiler_params=pltpu.CompilerParams(
            dimension_semantics=("arbitrary",)),
    )(xpad, params["conv_w2d"], params["conv_b2"], params["lin_w3"], params["lin_b2"])


def epsilon_c_reference(params, state):
    """Pure-JAX reference mirroring the PyTorch forward."""
    y = jax.lax.conv_general_dilated(
        state, params["conv_w"], window_strides=(1, 1), padding=((1, 1), (1, 1)),
        dimension_numbers=("NCHW", "OIHW", "NCHW"))
    y = jax.nn.relu(y + params["conv_b"][None, :, None, None])
    y = y.reshape(y.shape[0], -1)
    return jax.nn.relu(y @ params["lin_w"].T + params["lin_b"])


if __name__ == "__main__":
    key = jax.random.PRNGKey(0)
    kx, kp = jax.random.split(key)

    B, Cin, H, W = 2, 4, 10, 10
    state = jax.random.normal(kx, (B, Cin, H, W), jnp.float32)
    params = init_params(kp, n_features=Cin, input_shape=(H, W),
                         embeddings_size=128, subchannels=64)

    out = jax.block_until_ready(epsilon_c_forward(params, state))

    ref = epsilon_c_reference(params, state)
    assert out.shape == (B, 128)
    assert jnp.allclose(out, ref, rtol=1e-4, atol=1e-4), "mismatch vs reference"

    print("KERNEL_OK")
</pallas_src>

<mosaic_0001>
module attributes {stable_mosaic.version = 11 : i64} {
  func.func @_epsilon_c_kernel(%arg0: i32, %arg1: memref<2x4x128xf32, #tpu.memory_space<vmem>>, %arg2: memref<64x36xf32, #tpu.memory_space<vmem>>, %arg3: memref<64x1xf32, #tpu.memory_space<vmem>>, %arg4: memref<16x100x128xf32, #tpu.memory_space<vmem>>, %arg5: memref<1x128xf32, #tpu.memory_space<vmem>>, %arg6: memref<2x128xf32, #tpu.memory_space<vmem>>, %arg7: memref<4x2x16x100xf32, #tpu.memory_space<vmem>>) attributes {dimension_semantics = [#tpu.dimension_semantics<arbitrary>], iteration_bounds = array<i64: 4>, scalar_prefetch = 0 : i64, scratch_operands = 1 : i64, tpu.core_type = #tpu.core_type<tc>, window_params = [{pipeline_mode = #tpu.pipeline_mode<synchronous>, transform_indices = @transform_0, window_bounds = array<i64: 2, 4, 128>}, {pipeline_mode = #tpu.pipeline_mode<synchronous>, transform_indices = @transform_1, window_bounds = array<i64: 64, 36>}, {pipeline_mode = #tpu.pipeline_mode<synchronous>, transform_indices = @transform_2, window_bounds = array<i64: 64, 1>}, {transform_indices = @transform_3, window_bounds = array<i64: 16, 100, 128>}, {pipeline_mode = #tpu.pipeline_mode<synchronous>, transform_indices = @transform_4, window_bounds = array<i64: 1, 128>}, {pipeline_mode = #tpu.pipeline_mode<synchronous>, transform_indices = @transform_5, window_bounds = array<i64: 2, 128>}]} {
    %c0_i32 = arith.constant 0 : i32
    %0 = arith.cmpi eq, %arg0, %c0_i32 : i32
    %1 = arith.extui %0 : i1 to i32
    %c0_i32_0 = arith.constant 0 : i32
    %2 = arith.cmpi ne, %1, %c0_i32_0 : i32
    scf.if %2 {
      %c0_56 = arith.constant 0 : index
      %c0_57 = arith.constant 0 : index
      %c0_58 = arith.constant 0 : index
      %107 = vector.load %arg1[%c0_56, %c0_57, %c0_58] : memref<2x4x128xf32, #tpu.memory_space<vmem>>, vector<2x4x128xf32>
      %c0_59 = arith.constant 0 : index
      %c0_60 = arith.constant 0 : index
      %108 = vector.load %arg2[%c0_59, %c0_60] : memref<64x36xf32, #tpu.memory_space<vmem>>, vector<64x36xf32>
      %109 = tpu.iota {dimensions = array<i32: 1>} : vector<4x100xi32>
      %c10_i32 = arith.constant 10 : i32
      %c0_i32_61 = arith.constant 0 : i32
      %110 = arith.cmpi eq, %c10_i32, %c0_i32_61 : i32
      %c1_i32 = arith.constant 1 : i32
      %111 = arith.select %110, %c1_i32, %c10_i32 : i32
      %112 = vector.broadcast %111 : i32 to vector<4x100xi32>
      %113 = arith.remsi %109, %112 : vector<4x100xi32>
      %c0_i32_62 = arith.constant 0 : i32
      %114 = vector.broadcast %c0_i32_62 : i32 to vector<4x100xi32>
      %115 = arith.cmpi ne, %113, %114 : vector<4x100xi32>
      %c0_i32_63 = arith.constant 0 : i32
      %116 = vector.broadcast %c0_i32_63 : i32 to vector<4x100xi32>
      %117 = arith.cmpi slt, %113, %116 : vector<4x100xi32>
      %c0_i32_64 = arith.constant 0 : i32
      %118 = arith.cmpi slt, %111, %c0_i32_64 : i32
      %119 = vector.broadcast %118 : i1 to vector<4x100xi1>
      %120 = vector.broadcast %119 : vector<4x100xi1> to vector<4x100xi1>
      %121 = arith.xori %117, %120 : vector<4x100xi1>
      %122 = arith.andi %121, %115 : vector<4x100xi1>
      %123 = vector.broadcast %111 : i32 to vector<4x100xi32>
      %124 = arith.addi %113, %123 : vector<4x100xi32>
      %125 = arith.select %122, %124, %113 : vector<4x100xi1>, vector<4x100xi32>
      %c1_i32_65 = arith.constant 1 : i32
      %126 = vector.broadcast %c1_i32_65 : i32 to vector<4x100xi32>
      %127 = arith.cmpi sge, %125, %126 : vector<4x100xi32>
      %c8_i32 = arith.constant 8 : i32
      %128 = vector.broadcast %c8_i32 : i32 to vector<4x100xi32>
      %129 = arith.cmpi sle, %125, %128 : vector<4x100xi32>
      %cst_66 = arith.constant 0.000000e+00 : f32
      %130 = vector.broadcast %cst_66 : f32 to vector<64x100xf32>
      %131 = vector.extract_strided_slice %107 {offsets = [0, 0, 0], sizes = [1, 4, 100], strides = [1, 1, 1]} : vector<2x4x128xf32> to vector<1x4x100xf32>
      %132 = vector.shape_cast %131 : vector<1x4x100xf32> to vector<4x100xf32>
      %cst_67 = arith.constant 0.000000e+00 : f32
      %133 = vector.broadcast %cst_67 : f32 to vector<4x100xf32>
      %134 = arith.select %127, %132, %133 : vector<4x100xi1>, vector<4x100xf32>
      %135 = vector.extract_strided_slice %108 {offsets = [0, 0], sizes = [64, 4], strides = [1, 1]} : vector<64x36xf32> to vector<64x4xf32>
      %cst_68 = arith.constant dense<0.000000e+00> : vector<64x100xf32>
      %136 = tpu.matmul %135, %134, %cst_68 {dimension_numbers = #tpu.dot_dimension_numbers<[1], [0], [0], [1], [0, 0, 1, 1], [], []>} : vector<64x4xf32>, vector<4x100xf32>, vector<64x100xf32> -> vector<64x100xf32>
      %137 = arith.addf %130, %136 : vector<64x100xf32>
      %138 = vector.extract_strided_slice %107 {offsets = [0, 0, 1], sizes = [1, 4, 100], strides = [1, 1, 1]} : vector<2x4x128xf32> to vector<1x4x100xf32>
      %139 = vector.shape_cast %138 : vector<1x4x100xf32> to vector<4x100xf32>
      %140 = vector.extract_strided_slice %108 {offsets = [0, 4], sizes = [64, 4], strides = [1, 1]} : vector<64x36xf32> to vector<64x4xf32>
      %cst_69 = arith.constant dense<0.000000e+00> : vector<64x100xf32>
      %141 = tpu.matmul %140, %139, %cst_69 {dimension_numbers = #tpu.dot_dimension_numbers<[1], [0], [0], [1], [0, 0, 1, 1], [], []>} : vector<64x4xf32>, vector<4x100xf32>, vector<64x100xf32> -> vector<64x100xf32>
      %142 = arith.addf %137, %141 : vector<64x100xf32>
      %143 = vector.extract_strided_slice %107 {offsets = [0, 0, 2], sizes = [1, 4, 100], strides = [1, 1, 1]} : vector<2x4x128xf32> to vector<1x4x100xf32>
      %144 = vector.shape_cast %143 : vector<1x4x100xf32> to vector<4x100xf32>
      %cst_70 = arith.constant 0.000000e+00 : f32
      %145 = vector.broadcast %cst_70 : f32 to vector<4x100xf32>
      %146 = arith.select %129, %144, %145 : vector<4x100xi1>, vector<4x100xf32>
      %147 = vector.extract_strided_slice %108 {offsets = [0, 8], sizes = [64, 4], strides = [1, 1]} : vector<64x36xf32> to vector<64x4xf32>
      %cst_71 = arith.constant dense<0.000000e+00> : vector<64x100xf32>
      %148 = tpu.matmul %147, %146, %cst_71 {dimension_numbers = #tpu.dot_dimension_numbers<[1], [0], [0], [1], [0, 0, 1, 1], [], []>} : vector<64x4xf32>, vector<4x100xf32>, vector<64x100xf32> -> vector<64x100xf32>
      %149 = arith.addf %142, %148 : vector<64x100xf32>
      %150 = vector.extract_strided_slice %107 {offsets = [0, 0, 10], sizes = [1, 4, 100], strides = [1, 1, 1]} : vector<2x4x128xf32> to vector<1x4x100xf32>
      %151 = vector.shape_cast %150 : vector<1x4x100xf32> to vector<4x100xf32>
      %cst_72 = arith.constant 0.000000e+00 : f32
      %152 = vector.broadcast %cst_72 : f32 to vector<4x100xf32>
      %153 = arith.select %127, %151, %152 : vector<4x100xi1>, vector<4x100xf32>
      %154 = vector.extract_strided_slice %108 {offsets = [0, 12], sizes = [64, 4], strides = [1, 1]} : vector<64x36xf32> to vector<64x4xf32>
      %cst_73 = arith.constant dense<0.000000e+00> : vector<64x100xf32>
      %155 = tpu.matmul %154, %153, %cst_73 {dimension_numbers = #tpu.dot_dimension_numbers<[1], [0], [0], [1], [0, 0, 1, 1], [], []>} : vector<64x4xf32>, vector<4x100xf32>, vector<64x100xf32> -> vector<64x100xf32>
      %156 = arith.addf %149, %155 : vector<64x100xf32>
      %157 = vector.extract_strided_slice %107 {offsets = [0, 0, 11], sizes = [1, 4, 100], strides = [1, 1, 1]} : vector<2x4x128xf32> to vector<1x4x100xf32>
      %158 = vector.shape_cast %157 : vector<1x4x100xf32> to vector<4x100xf32>
      %159 = vector.extract_strided_slice %108 {offsets = [0, 16], sizes = [64, 4], strides = [1, 1]} : vector<64x36xf32> to vector<64x4xf32>
      %cst_74 = arith.constant dense<0.000000e+00> : vector<64x100xf32>
      %160 = tpu.matmul %159, %158, %cst_74 {dimension_numbers = #tpu.dot_dimension_numbers<[1], [0], [0], [1], [0, 0, 1, 1], [], []>} : vector<64x4xf32>, vector<4x100xf32>, vector<64x100xf32> -> vector<64x100xf32>
      %161 = arith.addf %156, %160 : vector<64x100xf32>
      %162 = vector.extract_strided_slice %107 {offsets = [0, 0, 12], sizes = [1, 4, 100], strides = [1, 1, 1]} : vector<2x4x128xf32> to vector<1x4x100xf32>
      %163 = vector.shape_cast %162 : vector<1x4x100xf32> to vector<4x100xf32>
      %cst_75 = arith.constant 0.000000e+00 : f32
      %164 = vector.broadcast %cst_75 : f32 to vector<4x100xf32>
      %165 = arith.select %129, %163, %164 : vector<4x100xi1>, vector<4x100xf32>
      %166 = vector.extract_strided_slice %108 {offsets = [0, 20], sizes = [64, 4], strides = [1, 1]} : vector<64x36xf32> to vector<64x4xf32>
      %cst_76 = arith.constant dense<0.000000e+00> : vector<64x100xf32>
      %167 = tpu.matmul %166, %165, %cst_76 {dimension_numbers = #tpu.dot_dimension_numbers<[1], [0], [0], [1], [0, 0, 1, 1], [], []>} : vector<64x4xf32>, vector<4x100xf32>, vector<64x100xf32> -> vector<64x100xf32>
      %168 = arith.addf %161, %167 : vector<64x100xf32>
      %169 = vector.extract_strided_slice %107 {offsets = [0, 0, 20], sizes = [1, 4, 100], strides = [1, 1, 1]} : vector<2x4x128xf32> to vector<1x4x100xf32>
      %170 = vector.shape_cast %169 : vector<1x4x100xf32> to vector<4x100xf32>
      %cst_77 = arith.constant 0.000000e+00 : f32
      %171 = vector.broadcast %cst_77 : f32 to vector<4x100xf32>
      %172 = arith.select %127, %170, %171 : vector<4x100xi1>, vector<4x100xf32>
      %173 = vector.extract_strided_slice %108 {offsets = [0, 24], sizes = [64, 4], strides = [1, 1]} : vector<64x36xf32> to vector<64x4xf32>
      %cst_78 = arith.constant dense<0.000000e+00> : vector<64x100xf32>
      %174 = tpu.matmul %173, %172, %cst_78 {dimension_numbers = #tpu.dot_dimension_numbers<[1], [0], [0], [1], [0, 0, 1, 1], [], []>} : vector<64x4xf32>, vector<4x100xf32>, vector<64x100xf32> -> vector<64x100xf32>
      %175 = arith.addf %168, %174 : vector<64x100xf32>
      %176 = vector.extract_strided_slice %107 {offsets = [0, 0, 21], sizes = [1, 4, 100], strides = [1, 1, 1]} : vector<2x4x128xf32> to vector<1x4x100xf32>
      %177 = vector.shape_cast %176 : vector<1x4x100xf32> to vector<4x100xf32>
      %178 = vector.extract_strided_slice %108 {offsets = [0, 28], sizes = [64, 4], strides = [1, 1]} : vector<64x36xf32> to vector<64x4xf32>
      %cst_79 = arith.constant dense<0.000000e+00> : vector<64x100xf32>
      %179 = tpu.matmul %178, %177, %cst_79 {dimension_numbers = #tpu.dot_dimension_numbers<[1], [0], [0], [1], [0, 0, 1, 1], [], []>} : vector<64x4xf32>, vector<4x100xf32>, vector<64x100xf32> -> vector<64x100xf32>
      %180 = arith.addf %175, %179 : vector<64x100xf32>
      %181 = vector.extract_strided_slice %107 {offsets = [0, 0, 22], sizes = [1, 4, 100], strides = [1, 1, 1]} : vector<2x4x128xf32> to vector<1x4x100xf32>
      %182 = vector.shape_cast %181 : vector<1x4x100xf32> to vector<4x100xf32>
      %cst_80 = arith.constant 0.000000e+00 : f32
      %183 = vector.broadcast %cst_80 : f32 to vector<4x100xf32>
      %184 = arith.select %129, %182, %183 : vector<4x100xi1>, vector<4x100xf32>
      %185 = vector.extract_strided_slice %108 {offsets = [0, 32], sizes = [64, 4], strides = [1, 1]} : vector<64x36xf32> to vector<64x4xf32>
      %cst_81 = arith.constant dense<0.000000e+00> : vector<64x100xf32>
      %186 = tpu.matmul %185, %184, %cst_81 {dimension_numbers = #tpu.dot_dimension_numbers<[1], [0], [0], [1], [0, 0, 1, 1], [], []>} : vector<64x4xf32>, vector<4x100xf32>, vector<64x100xf32> -> vector<64x100xf32>
      %187 = arith.addf %180, %186 : vector<64x100xf32>
      %c0_82 = arith.constant 0 : index
      %c0_83 = arith.constant 0 : index
      %188 = vector.load %arg3[%c0_82, %c0_83] : memref<64x1xf32, #tpu.memory_space<vmem>>, vector<64x1xf32>
      %189 = vector.broadcast %188 : vector<64x1xf32> to vector<64x100xf32>
      %190 = arith.addf %187, %189 : vector<64x100xf32>
      %cst_84 = arith.constant 0.000000e+00 : f32
      %191 = vector.broadcast %cst_84 : f32 to vector<64x100xf32>
      %192 = arith.maximumf %190, %191 : vector<64x100xf32>
      %193 = vector.extract_strided_slice %192 {offsets = [0, 0], sizes = [16, 100], strides = [1, 1]} : vector<64x100xf32> to vector<16x100xf32>
      %c0_85 = arith.constant 0 : index
      %c0_86 = arith.constant 0 : index
      %c0_87 = arith.constant 0 : index
      %c0_88 = arith.constant 0 : index
      %194 = vector.load %arg7[%c0_85, %c0_86, %c0_87, %c0_88] : memref<4x2x16x100xf32, #tpu.memory_space<vmem>>, vector<1x1x16x100xf32>
      %195 = vector.shape_cast %194 : vector<1x1x16x100xf32> to vector<16x100xf32>
      %196 = vector.shape_cast %193 : vector<16x100xf32> to vector<1x1x16x100xf32>
      tpu.vector_store %arg7[%c0_85, %c0_86, %c0_87, %c0_88], %196 {strides = array<i32>} : memref<4x2x16x100xf32, #tpu.memory_space<vmem>>, vector<1x1x16x100xf32>,
      %197 = vector.extract_strided_slice %192 {offsets = [16, 0], sizes = [16, 100], strides = [1, 1]} : vector<64x100xf32> to vector<16x100xf32>
      %c1_89 = arith.constant 1 : index
      %c0_90 = arith.constant 0 : index
      %c0_91 = arith.constant 0 : index
      %c0_92 = arith.constant 0 : index
      %198 = vector.load %arg7[%c1_89, %c0_90, %c0_91, %c0_92] : memref<4x2x16x100xf32, #tpu.memory_space<vmem>>, vector<1x1x16x100xf32>
      %199 = vector.shape_cast %198 : vector<1x1x16x100xf32> to vector<16x100xf32>
      %200 = vector.shape_cast %197 : vector<16x100xf32> to vector<1x1x16x100xf32>
      tpu.vector_store %arg7[%c1_89, %c0_90, %c0_91, %c0_92], %200 {strides = array<i32>} : memref<4x2x16x100xf32, #tpu.memory_space<vmem>>, vector<1x1x16x100xf32>,
      %201 = vector.extract_strided_slice %192 {offsets = [32, 0], sizes = [16, 100], strides = [1, 1]} : vector<64x100xf32> to vector<16x100xf32>
      %c2_93 = arith.constant 2 : index
      %c0_94 = arith.constant 0 : index
      %c0_95 = arith.constant 0 : index
      %c0_96 = arith.constant 0 : index
      %202 = vector.load %arg7[%c2_93, %c0_94, %c0_95, %c0_96] : memref<4x2x16x100xf32, #tpu.memory_space<vmem>>, vector<1x1x16x100xf32>
      %203 = vector.shape_cast %202 : vector<1x1x16x100xf32> to vector<16x100xf32>
      %204 = vector.shape_cast %201 : vector<16x100xf32> to vector<1x1x16x100xf32>
      tpu.vector_store %arg7[%c2_93, %c0_94, %c0_95, %c0_96], %204 {strides = array<i32>} : memref<4x2x16x100xf32, #tpu.memory_space<vmem>>, vector<1x1x16x100xf32>,
      %205 = vector.extract_strided_slice %192 {offsets = [48, 0], sizes = [16, 100], strides = [1, 1]} : vector<64x100xf32> to vector<16x100xf32>
      %c3_97 = arith.constant 3 : index
      %c0_98 = arith.constant 0 : index
      %c0_99 = arith.constant 0 : index
      %c0_100 = arith.constant 0 : index
      %206 = vector.load %arg7[%c3_97, %c0_98, %c0_99, %c0_100] : memref<4x2x16x100xf32, #tpu.memory_space<vmem>>, vector<1x1x16x100xf32>
      %207 = vector.shape_cast %206 : vector<1x1x16x100xf32> to vector<16x100xf32>
      %208 = vector.shape_cast %205 : vector<16x100xf32> to vector<1x1x16x100xf32>
      tpu.vector_store %arg7[%c3_97, %c0_98, %c0_99, %c0_100], %208 {strides = array<i32>} : memref<4x2x16x100xf32, #tpu.memory_space<vmem>>, vector<1x1x16x100xf32>,
      %cst_101 = arith.constant 0.000000e+00 : f32
      %209 = vector.broadcast %cst_101 : f32 to vector<64x100xf32>
      %210 = vector.extract_strided_slice %107 {offsets = [1, 0, 0], sizes = [1, 4, 100], strides = [1, 1, 1]} : vector<2x4x128xf32> to vector<1x4x100xf32>
      %211 = vector.shape_cast %210 : vector<1x4x100xf32> to vector<4x100xf32>
      %cst_102 = arith.constant 0.000000e+00 : f32
      %212 = vector.broadcast %cst_102 : f32 to vector<4x100xf32>
      %213 = arith.select %127, %211, %212 : vector<4x100xi1>, vector<4x100xf32>
      %214 = vector.extract_strided_slice %108 {offsets = [0, 0], sizes = [64, 4], strides = [1, 1]} : vector<64x36xf32> to vector<64x4xf32>
      %cst_103 = arith.constant dense<0.000000e+00> : vector<64x100xf32>
      %215 = tpu.matmul %214, %213, %cst_103 {dimension_numbers = #tpu.dot_dimension_numbers<[1], [0], [0], [1], [0, 0, 1, 1], [], []>} : vector<64x4xf32>, vector<4x100xf32>, vector<64x100xf32> -> vector<64x100xf32>
      %216 = arith.addf %209, %215 : vector<64x100xf32>
      %217 = vector.extract_strided_slice %107 {offsets = [1, 0, 1], sizes = [1, 4, 100], strides = [1, 1, 1]} : vector<2x4x128xf32> to vector<1x4x100xf32>
      %218 = vector.shape_cast %217 : vector<1x4x100xf32> to vector<4x100xf32>
      %219 = vector.extract_strided_slice %108 {offsets = [0, 4], sizes = [64, 4], strides = [1, 1]} : vector<64x36xf32> to vector<64x4xf32>
      %cst_104 = arith.constant dense<0.000000e+00> : vector<64x100xf32>
      %220 = tpu.matmul %219, %218, %cst_104 {dimension_numbers = #tpu.dot_dimension_numbers<[1], [0], [0], [1], [0, 0, 1, 1], [], []>} : vector<64x4xf32>, vector<4x100xf32>, vector<64x100xf32> -> vector<64x100xf32>
      %221 = arith.addf %216, %220 : vector<64x100xf32>
      %222 = vector.extract_strided_slice %107 {offsets = [1, 0, 2], sizes = [1, 4, 100], strides = [1, 1, 1]} : vector<2x4x128xf32> to vector<1x4x100xf32>
      %223 = vector.shape_cast %222 : vector<1x4x100xf32> to vector<4x100xf32>
      %cst_105 = arith.constant 0.000000e+00 : f32
      %224 = vector.broadcast %cst_105 : f32 to vector<4x100xf32>
      %225 = arith.select %129, %223, %224 : vector<4x100xi1>, vector<4x100xf32>
      %226 = vector.extract_strided_slice %108 {offsets = [0, 8], sizes = [64, 4], strides = [1, 1]} : vector<64x36xf32> to vector<64x4xf32>
      %cst_106 = arith.constant dense<0.000000e+00> : vector<64x100xf32>
      %227 = tpu.matmul %226, %225, %cst_106 {dimension_numbers = #tpu.dot_dimension_numbers<[1], [0], [0], [1], [0, 0, 1, 1], [], []>} : vector<64x4xf32>, vector<4x100xf32>, vector<64x100xf32> -> vector<64x100xf32>
      %228 = arith.addf %221, %227 : vector<64x100xf32>
      %229 = vector.extract_strided_slice %107 {offsets = [1, 0, 10], sizes = [1, 4, 100], strides = [1, 1, 1]} : vector<2x4x128xf32> to vector<1x4x100xf32>
      %230 = vector.shape_cast %229 : vector<1x4x100xf32> to vector<4x100xf32>
      %cst_107 = arith.constant 0.000000e+00 : f32
      %231 = vector.broadcast %cst_107 : f32 to vector<4x100xf32>
      %232 = arith.select %127, %230, %231 : vector<4x100xi1>, vector<4x100xf32>
      %233 = vector.extract_strided_slice %108 {offsets = [0, 12], sizes = [64, 4], strides = [1, 1]} : vector<64x36xf32> to vector<64x4xf32>
      %cst_108 = arith.constant dense<0.000000e+00> : vector<64x100xf32>
      %234 = tpu.matmul %233, %232, %cst_108 {dimension_numbers = #tpu.dot_dimension_numbers<[1], [0], [0], [1], [0, 0, 1, 1], [], []>} : vector<64x4xf32>, vector<4x100xf32>, vector<64x100xf32> -> vector<64x100xf32>
      %235 = arith.addf %228, %234 : vector<64x100xf32>
      %236 = vector.extract_strided_slice %107 {offsets = [1, 0, 11], sizes = [1, 4, 100], strides = [1, 1, 1]} : vector<2x4x128xf32> to vector<1x4x100xf32>
      %237 = vector.shape_cast %236 : vector<1x4x100xf32> to vector<4x100xf32>
      %238 = vector.extract_strided_slice %108 {offsets = [0, 16], sizes = [64, 4], strides = [1, 1]} : vector<64x36xf32> to vector<64x4xf32>
      %cst_109 = arith.constant dense<0.000000e+00> : vector<64x100xf32>
      %239 = tpu.matmul %238, %237, %cst_109 {dimension_numbers = #tpu.dot_dimension_numbers<[1], [0], [0], [1], [0, 0, 1, 1], [], []>} : vector<64x4xf32>, vector<4x100xf32>, vector<64x100xf32> -> vector<64x100xf32>
      %240 = arith.addf %235, %239 : vector<64x100xf32>
      %241 = vector.extract_strided_slice %107 {offsets = [1, 0, 12], sizes = [1, 4, 100], strides = [1, 1, 1]} : vector<2x4x128xf32> to vector<1x4x100xf32>
      %242 = vector.shape_cast %241 : vector<1x4x100xf32> to vector<4x100xf32>
      %cst_110 = arith.constant 0.000000e+00 : f32
      %243 = vector.broadcast %cst_110 : f32 to vector<4x100xf32>
      %244 = arith.select %129, %242, %243 : vector<4x100xi1>, vector<4x100xf32>
      %245 = vector.extract_strided_slice %108 {offsets = [0, 20], sizes = [64, 4], strides = [1, 1]} : vector<64x36xf32> to vector<64x4xf32>
      %cst_111 = arith.constant dense<0.000000e+00> : vector<64x100xf32>
      %246 = tpu.matmul %245, %244, %cst_111 {dimension_numbers = #tpu.dot_dimension_numbers<[1], [0], [0], [1], [0, 0, 1, 1], [], []>} : vector<64x4xf32>, vector<4x100xf32>, vector<64x100xf32> -> vector<64x100xf32>
      %247 = arith.addf %240, %246 : vector<64x100xf32>
      %248 = vector.extract_strided_slice %107 {offsets = [1, 0, 20], sizes = [1, 4, 100], strides = [1, 1, 1]} : vector<2x4x128xf32> to vector<1x4x100xf32>
      %249 = vector.shape_cast %248 : vector<1x4x100xf32> to vector<4x100xf32>
      %cst_112 = arith.constant 0.000000e+00 : f32
      %250 = vector.broadcast %cst_112 : f32 to vector<4x100xf32>
      %251 = arith.select %127, %249, %250 : vector<4x100xi1>, vector<4x100xf32>
      %252 = vector.extract_strided_slice %108 {offsets = [0, 24], sizes = [64, 4], strides = [1, 1]} : vector<64x36xf32> to vector<64x4xf32>
      %cst_113 = arith.constant dense<0.000000e+00> : vector<64x100xf32>
      %253 = tpu.matmul %252, %251, %cst_113 {dimension_numbers = #tpu.dot_dimension_numbers<[1], [0], [0], [1], [0, 0, 1, 1], [], []>} : vector<64x4xf32>, vector<4x100xf32>, vector<64x100xf32> -> vector<64x100xf32>
      %254 = arith.addf %247, %253 : vector<64x100xf32>
      %255 = vector.extract_strided_slice %107 {offsets = [1, 0, 21], sizes = [1, 4, 100], strides = [1, 1, 1]} : vector<2x4x128xf32> to vector<1x4x100xf32>
      %256 = vector.shape_cast %255 : vector<1x4x100xf32> to vector<4x100xf32>
      %257 = vector.extract_strided_slice %108 {offsets = [0, 28], sizes = [64, 4], strides = [1, 1]} : vector<64x36xf32> to vector<64x4xf32>
      %cst_114 = arith.constant dense<0.000000e+00> : vector<64x100xf32>
      %258 = tpu.matmul %257, %256, %cst_114 {dimension_numbers = #tpu.dot_dimension_numbers<[1], [0], [0], [1], [0, 0, 1, 1], [], []>} : vector<64x4xf32>, vector<4x100xf32>, vector<64x100xf32> -> vector<64x100xf32>
      %259 = arith.addf %254, %258 : vector<64x100xf32>
      %260 = vector.extract_strided_slice %107 {offsets = [1, 0, 22], sizes = [1, 4, 100], strides = [1, 1, 1]} : vector<2x4x128xf32> to vector<1x4x100xf32>
      %261 = vector.shape_cast %260 : vector<1x4x100xf32> to vector<4x100xf32>
      %cst_115 = arith.constant 0.000000e+00 : f32
      %262 = vector.broadcast %cst_115 : f32 to vector<4x100xf32>
      %263 = arith.select %129, %261, %262 : vector<4x100xi1>, vector<4x100xf32>
      %264 = vector.extract_strided_slice %108 {offsets = [0, 32], sizes = [64, 4], strides = [1, 1]} : vector<64x36xf32> to vector<64x4xf32>
      %cst_116 = arith.constant dense<0.000000e+00> : vector<64x100xf32>
      %265 = tpu.matmul %264, %263, %cst_116 {dimension_numbers = #tpu.dot_dimension_numbers<[1], [0], [0], [1], [0, 0, 1, 1], [], []>} : vector<64x4xf32>, vector<4x100xf32>, vector<64x100xf32> -> vector<64x100xf32>
      %266 = arith.addf %259, %265 : vector<64x100xf32>
      %c0_117 = arith.constant 0 : index
      %c0_118 = arith.constant 0 : index
      %267 = vector.load %arg3[%c0_117, %c0_118] : memref<64x1xf32, #tpu.memory_space<vmem>>, vector<64x1xf32>
      %268 = vector.broadcast %267 : vector<64x1xf32> to vector<64x100xf32>
      %269 = arith.addf %266, %268 : vector<64x100xf32>
      %cst_119 = arith.constant 0.000000e+00 : f32
      %270 = vector.broadcast %cst_119 : f32 to vector<64x100xf32>
      %271 = arith.maximumf %269, %270 : vector<64x100xf32>
      %272 = vector.extract_strided_slice %271 {offsets = [0, 0], sizes = [16, 100], strides = [1, 1]} : vector<64x100xf32> to vector<16x100xf32>
      %c0_120 = arith.constant 0 : index
      %c1_121 = arith.constant 1 : index
      %c0_122 = arith.constant 0 : index
      %c0_123 = arith.constant 0 : index
      %273 = vector.load %arg7[%c0_120, %c1_121, %c0_122, %c0_123] : memref<4x2x16x100xf32, #tpu.memory_space<vmem>>, vector<1x1x16x100xf32>
      %274 = vector.shape_cast %273 : vector<1x1x16x100xf32> to vector<16x100xf32>
      %275 = vector.shape_cast %272 : vector<16x100xf32> to vector<1x1x16x100xf32>
      tpu.vector_store %arg7[%c0_120, %c1_121, %c0_122, %c0_123], %275 {strides = array<i32>} : memref<4x2x16x100xf32, #tpu.memory_space<vmem>>, vector<1x1x16x100xf32>,
      %276 = vector.extract_strided_slice %271 {offsets = [16, 0], sizes = [16, 100], strides = [1, 1]} : vector<64x100xf32> to vector<16x100xf32>
      %c1_124 = arith.constant 1 : index
      %c1_125 = arith.constant 1 : index
      %c0_126 = arith.constant 0 : index
      %c0_127 = arith.constant 0 : index
      %277 = vector.load %arg7[%c1_124, %c1_125, %c0_126, %c0_127] : memref<4x2x16x100xf32, #tpu.memory_space<vmem>>, vector<1x1x16x100xf32>
      %278 = vector.shape_cast %277 : vector<1x1x16x100xf32> to vector<16x100xf32>
      %279 = vector.shape_cast %276 : vector<16x100xf32> to vector<1x1x16x100xf32>
      tpu.vector_store %arg7[%c1_124, %c1_125, %c0_126, %c0_127], %279 {strides = array<i32>} : memref<4x2x16x100xf32, #tpu.memory_space<vmem>>, vector<1x1x16x100xf32>,
      %280 = vector.extract_strided_slice %271 {offsets = [32, 0], sizes = [16, 100], strides = [1, 1]} : vector<64x100xf32> to vector<16x100xf32>
      %c2_128 = arith.constant 2 : index
      %c1_129 = arith.constant 1 : index
      %c0_130 = arith.constant 0 : index
      %c0_131 = arith.constant 0 : index
      %281 = vector.load %arg7[%c2_128, %c1_129, %c0_130, %c0_131] : memref<4x2x16x100xf32, #tpu.memory_space<vmem>>, vector<1x1x16x100xf32>
      %282 = vector.shape_cast %281 : vector<1x1x16x100xf32> to vector<16x100xf32>
      %283 = vector.shape_cast %280 : vector<16x100xf32> to vector<1x1x16x100xf32>
      tpu.vector_store %arg7[%c2_128, %c1_129, %c0_130, %c0_131], %283 {strides = array<i32>} : memref<4x2x16x100xf32, #tpu.memory_space<vmem>>, vector<1x1x16x100xf32>,
      %284 = vector.extract_strided_slice %271 {offsets = [48, 0], sizes = [16, 100], strides = [1, 1]} : vector<64x100xf32> to vector<16x100xf32>
      %c3_132 = arith.constant 3 : index
      %c1_133 = arith.constant 1 : index
      %c0_134 = arith.constant 0 : index
      %c0_135 = arith.constant 0 : index
      %285 = vector.load %arg7[%c3_132, %c1_133, %c0_134, %c0_135] : memref<4x2x16x100xf32, #tpu.memory_space<vmem>>, vector<1x1x16x100xf32>
      %286 = vector.shape_cast %285 : vector<1x1x16x100xf32> to vector<16x100xf32>
      %287 = vector.shape_cast %284 : vector<16x100xf32> to vector<1x1x16x100xf32>
      tpu.vector_store %arg7[%c3_132, %c1_133, %c0_134, %c0_135], %287 {strides = array<i32>} : memref<4x2x16x100xf32, #tpu.memory_space<vmem>>, vector<1x1x16x100xf32>,
      %c0_136 = arith.constant 0 : index
      %c0_137 = arith.constant 0 : index
      %288 = vector.load %arg5[%c0_136, %c0_137] : memref<1x128xf32, #tpu.memory_space<vmem>>, vector<1x128xf32>
      %289 = vector.shape_cast %288 : vector<1x128xf32> to vector<1x128xf32>
      %290 = vector.broadcast %289 : vector<1x128xf32> to vector<2x128xf32>
      %c0_138 = arith.constant 0 : index
      %c0_139 = arith.constant 0 : index
      %291 = vector.load %arg6[%c0_138, %c0_139] : memref<2x128xf32, #tpu.memory_space<vmem>>, vector<2x128xf32>
      tpu.vector_store %arg6[%c0_138, %c0_139], %290 {strides = array<i32>} : memref<2x128xf32, #tpu.memory_space<vmem>>, vector<2x128xf32>,
    } else {
    }
    %3 = arith.index_cast %arg0 : i32 to index
    %c0 = arith.constant 0 : index
    %c0_1 = arith.constant 0 : index
    %c0_2 = arith.constant 0 : index
    %4 = vector.load %arg7[%3, %c0, %c0_1, %c0_2] : memref<4x2x16x100xf32, #tpu.memory_space<vmem>>, vector<1x2x16x100xf32>
    %5 = vector.shape_cast %4 : vector<1x2x16x100xf32> to vector<2x16x100xf32>
    %c0_3 = arith.constant 0 : index
    %c0_4 = arith.constant 0 : index
    %6 = vector.load %arg6[%c0_3, %c0_4] : memref<2x128xf32, #tpu.memory_space<vmem>>, vector<2x128xf32>
    %7 = vector.extract_strided_slice %5 {offsets = [0, 0, 0], sizes = [2, 1, 100], strides = [1, 1, 1]} : vector<2x16x100xf32> to vector<2x1x100xf32>
    %8 = vector.shape_cast %7 : vector<2x1x100xf32> to vector<2x100xf32>
    %c0_5 = arith.constant 0 : index
    %c0_6 = arith.constant 0 : index
    %c0_7 = arith.constant 0 : index
    %9 = vector.load %arg4[%c0_5, %c0_6, %c0_7] : memref<16x100x128xf32, #tpu.memory_space<vmem>>, vector<1x100x128xf32>
    %10 = vector.shape_cast %9 : vector<1x100x128xf32> to vector<100x128xf32>
    %cst = arith.constant dense<0.000000e+00> : vector<2x128xf32>
    %11 = tpu.matmul %8, %10, %cst {dimension_numbers = #tpu.dot_dimension_numbers<[1], [0], [0], [1], [0, 0, 1, 1], [], []>} : vector<2x100xf32>, vector<100x128xf32>, vector<2x128xf32> -> vector<2x128xf32>
    %12 = arith.addf %6, %11 : vector<2x128xf32>
    %13 = vector.extract_strided_slice %5 {offsets = [0, 1, 0], sizes = [2, 1, 100], strides = [1, 1, 1]} : vector<2x16x100xf32> to vector<2x1x100xf32>
    %14 = vector.shape_cast %13 : vector<2x1x100xf32> to vector<2x100xf32>
    %c1 = arith.constant 1 : index
    %c0_8 = arith.constant 0 : index
    %c0_9 = arith.constant 0 : index
    %15 = vector.load %arg4[%c1, %c0_8, %c0_9] : memref<16x100x128xf32, #tpu.memory_space<vmem>>, vector<1x100x128xf32>
    %16 = vector.shape_cast %15 : vector<1x100x128xf32> to vector<100x128xf32>
    %cst_10 = arith.constant dense<0.000000e+00> : vector<2x128xf32>
    %17 = tpu.matmul %14, %16, %cst_10 {dimension_numbers = #tpu.dot_dimension_numbers<[1], [0], [0], [1], [0, 0, 1, 1], [], []>} : vector<2x100xf32>, vector<100x128xf32>, vector<2x128xf32> -> vector<2x128xf32>
    %18 = arith.addf %12, %17 : vector<2x128xf32>
    %19 = vector.extract_strided_slice %5 {offsets = [0, 2, 0], sizes = [2, 1, 100], strides = [1, 1, 1]} : vector<2x16x100xf32> to vector<2x1x100xf32>
    %20 = vector.shape_cast %19 : vector<2x1x100xf32> to vector<2x100xf32>
    %c2 = arith.constant 2 : index
    %c0_11 = arith.constant 0 : index
    %c0_12 = arith.constant 0 : index
    %21 = vector.load %arg4[%c2, %c0_11, %c0_12] : memref<16x100x128xf32, #tpu.memory_space<vmem>>, vector<1x100x128xf32>
    %22 = vector.shape_cast %21 : vector<1x100x128xf32> to vector<100x128xf32>
    %cst_13 = arith.constant dense<0.000000e+00> : vector<2x128xf32>
    %23 = tpu.matmul %20, %22, %cst_13 {dimension_numbers = #tpu.dot_dimension_numbers<[1], [0], [0], [1], [0, 0, 1, 1], [], []>} : vector<2x100xf32>, vector<100x128xf32>, vector<2x128xf32> -> vector<2x128xf32>
    %24 = arith.addf %18, %23 : vector<2x128xf32>
    %25 = vector.extract_strided_slice %5 {offsets = [0, 3, 0], sizes = [2, 1, 100], strides = [1, 1, 1]} : vector<2x16x100xf32> to vector<2x1x100xf32>
    %26 = vector.shape_cast %25 : vector<2x1x100xf32> to vector<2x100xf32>
    %c3 = arith.constant 3 : index
    %c0_14 = arith.constant 0 : index
    %c0_15 = arith.constant 0 : index
    %27 = vector.load %arg4[%c3, %c0_14, %c0_15] : memref<16x100x128xf32, #tpu.memory_space<vmem>>, vector<1x100x128xf32>
    %28 = vector.shape_cast %27 : vector<1x100x128xf32> to vector<100x128xf32>
    %cst_16 = arith.constant dense<0.000000e+00> : vector<2x128xf32>
    %29 = tpu.matmul %26, %28, %cst_16 {dimension_numbers = #tpu.dot_dimension_numbers<[1], [0], [0], [1], [0, 0, 1, 1], [], []>} : vector<2x100xf32>, vector<100x128xf32>, vector<2x128xf32> -> vector<2x128xf32>
    %30 = arith.addf %24, %29 : vector<2x128xf32>
    %31 = vector.extract_strided_slice %5 {offsets = [0, 4, 0], sizes = [2, 1, 100], strides = [1, 1, 1]} : vector<2x16x100xf32> to vector<2x1x100xf32>
    %32 = vector.shape_cast %31 : vector<2x1x100xf32> to vector<2x100xf32>
    %c4 = arith.constant 4 : index
    %c0_17 = arith.constant 0 : index
    %c0_18 = arith.constant 0 : index
    %33 = vector.load %arg4[%c4, %c0_17, %c0_18] : memref<16x100x128xf32, #tpu.memory_space<vmem>>, vector<1x100x128xf32>
    %34 = vector.shape_cast %33 : vector<1x100x128xf32> to vector<100x128xf32>
    %cst_19 = arith.constant dense<0.000000e+00> : vector<2x128xf32>
    %35 = tpu.matmul %32, %34, %cst_19 {dimension_numbers = #tpu.dot_dimension_numbers<[1], [0], [0], [1], [0, 0, 1, 1], [], []>} : vector<2x100xf32>, vector<100x128xf32>, vector<2x128xf32> -> vector<2x128xf32>
    %36 = arith.addf %30, %35 : vector<2x128xf32>
    %37 = vector.extract_strided_slice %5 {offsets = [0, 5, 0], sizes = [2, 1, 100], strides = [1, 1, 1]} : vector<2x16x100xf32> to vector<2x1x100xf32>
    %38 = vector.shape_cast %37 : vector<2x1x100xf32> to vector<2x100xf32>
    %c5 = arith.constant 5 : index
    %c0_20 = arith.constant 0 : index
    %c0_21 = arith.constant 0 : index
    %39 = vector.load %arg4[%c5, %c0_20, %c0_21] : memref<16x100x128xf32, #tpu.memory_space<vmem>>, vector<1x100x128xf32>
    %40 = vector.shape_cast %39 : vector<1x100x128xf32> to vector<100x128xf32>
    %cst_22 = arith.constant dense<0.000000e+00> : vector<2x128xf32>
    %41 = tpu.matmul %38, %40, %cst_22 {dimension_numbers = #tpu.dot_dimension_numbers<[1], [0], [0], [1], [0, 0, 1, 1], [], []>} : vector<2x100xf32>, vector<100x128xf32>, vector<2x128xf32> -> vector<2x128xf32>
    %42 = arith.addf %36, %41 : vector<2x128xf32>
    %43 = vector.extract_strided_slice %5 {offsets = [0, 6, 0], sizes = [2, 1, 100], strides = [1, 1, 1]} : vector<2x16x100xf32> to vector<2x1x100xf32>
    %44 = vector.shape_cast %43 : vector<2x1x100xf32> to vector<2x100xf32>
    %c6 = arith.constant 6 : index
    %c0_23 = arith.constant 0 : index
    %c0_24 = arith.constant 0 : index
    %45 = vector.load %arg4[%c6, %c0_23, %c0_24] : memref<16x100x128xf32, #tpu.memory_space<vmem>>, vector<1x100x128xf32>
    %46 = vector.shape_cast %45 : vector<1x100x128xf32> to vector<100x128xf32>
    %cst_25 = arith.constant dense<0.000000e+00> : vector<2x128xf32>
    %47 = tpu.matmul %44, %46, %cst_25 {dimension_numbers = #tpu.dot_dimension_numbers<[1], [0], [0], [1], [0, 0, 1, 1], [], []>} : vector<2x100xf32>, vector<100x128xf32>, vector<2x128xf32> -> vector<2x128xf32>
    %48 = arith.addf %42, %47 : vector<2x128xf32>
    %49 = vector.extract_strided_slice %5 {offsets = [0, 7, 0], sizes = [2, 1, 100], strides = [1, 1, 1]} : vector<2x16x100xf32> to vector<2x1x100xf32>
    %50 = vector.shape_cast %49 : vector<2x1x100xf32> to vector<2x100xf32>
    %c7 = arith.constant 7 : index
    %c0_26 = arith.constant 0 : index
    %c0_27 = arith.constant 0 : index
    %51 = vector.load %arg4[%c7, %c0_26, %c0_27] : memref<16x100x128xf32, #tpu.memory_space<vmem>>, vector<1x100x128xf32>
    %52 = vector.shape_cast %51 : vector<1x100x128xf32> to vector<100x128xf32>
    %cst_28 = arith.constant dense<0.000000e+00> : vector<2x128xf32>
    %53 = tpu.matmul %50, %52, %cst_28 {dimension_numbers = #tpu.dot_dimension_numbers<[1], [0], [0], [1], [0, 0, 1, 1], [], []>} : vector<2x100xf32>, vector<100x128xf32>, vector<2x128xf32> -> vector<2x128xf32>
    %54 = arith.addf %48, %53 : vector<2x128xf32>
    %55 = vector.extract_strided_slice %5 {offsets = [0, 8, 0], sizes = [2, 1, 100], strides = [1, 1, 1]} : vector<2x16x100xf32> to vector<2x1x100xf32>
    %56 = vector.shape_cast %55 : vector<2x1x100xf32> to vector<2x100xf32>
    %c8 = arith.constant 8 : index
    %c0_29 = arith.constant 0 : index
    %c0_30 = arith.constant 0 : index
    %57 = vector.load %arg4[%c8, %c0_29, %c0_30] : memref<16x100x128xf32, #tpu.memory_space<vmem>>, vector<1x100x128xf32>
    %58 = vector.shape_cast %57 : vector<1x100x128xf32> to vector<100x128xf32>
    %cst_31 = arith.constant dense<0.000000e+00> : vector<2x128xf32>
    %59 = tpu.matmul %56, %58, %cst_31 {dimension_numbers = #tpu.dot_dimension_numbers<[1], [0], [0], [1], [0, 0, 1, 1], [], []>} : vector<2x100xf32>, vector<100x128xf32>, vector<2x128xf32> -> vector<2x128xf32>
    %60 = arith.addf %54, %59 : vector<2x128xf32>
    %61 = vector.extract_strided_slice %5 {offsets = [0, 9, 0], sizes = [2, 1, 100], strides = [1, 1, 1]} : vector<2x16x100xf32> to vector<2x1x100xf32>
    %62 = vector.shape_cast %61 : vector<2x1x100xf32> to vector<2x100xf32>
    %c9 = arith.constant 9 : index
    %c0_32 = arith.constant 0 : index
    %c0_33 = arith.constant 0 : index
    %63 = vector.load %arg4[%c9, %c0_32, %c0_33] : memref<16x100x128xf32, #tpu.memory_space<vmem>>, vector<1x100x128xf32>
    %64 = vector.shape_cast %63 : vector<1x100x128xf32> to vector<100x128xf32>
    %cst_34 = arith.constant dense<0.000000e+00> : vector<2x128xf32>
    %65 = tpu.matmul %62, %64, %cst_34 {dimension_numbers = #tpu.dot_dimension_numbers<[1], [0], [0], [1], [0, 0, 1, 1], [], []>} : vector<2x100xf32>, vector<100x128xf32>, vector<2x128xf32> -> vector<2x128xf32>
    %66 = arith.addf %60, %65 : vector<2x128xf32>
    %67 = vector.extract_strided_slice %5 {offsets = [0, 10, 0], sizes = [2, 1, 100], strides = [1, 1, 1]} : vector<2x16x100xf32> to vector<2x1x100xf32>
    %68 = vector.shape_cast %67 : vector<2x1x100xf32> to vector<2x100xf32>
    %c10 = arith.constant 10 : index
    %c0_35 = arith.constant 0 : index
    %c0_36 = arith.constant 0 : index
    %69 = vector.load %arg4[%c10, %c0_35, %c0_36] : memref<16x100x128xf32, #tpu.memory_space<vmem>>, vector<1x100x128xf32>
    %70 = vector.shape_cast %69 : vector<1x100x128xf32> to vector<100x128xf32>
    %cst_37 = arith.constant dense<0.000000e+00> : vector<2x128xf32>
    %71 = tpu.matmul %68, %70, %cst_37 {dimension_numbers = #tpu.dot_dimension_numbers<[1], [0], [0], [1], [0, 0, 1, 1], [], []>} : vector<2x100xf32>, vector<100x128xf32>, vector<2x128xf32> -> vector<2x128xf32>
    %72 = arith.addf %66, %71 : vector<2x128xf32>
    %73 = vector.extract_strided_slice %5 {offsets = [0, 11, 0], sizes = [2, 1, 100], strides = [1, 1, 1]} : vector<2x16x100xf32> to vector<2x1x100xf32>
    %74 = vector.shape_cast %73 : vector<2x1x100xf32> to vector<2x100xf32>
    %c11 = arith.constant 11 : index
    %c0_38 = arith.constant 0 : index
    %c0_39 = arith.constant 0 : index
    %75 = vector.load %arg4[%c11, %c0_38, %c0_39] : memref<16x100x128xf32, #tpu.memory_space<vmem>>, vector<1x100x128xf32>
    %76 = vector.shape_cast %75 : vector<1x100x128xf32> to vector<100x128xf32>
    %cst_40 = arith.constant dense<0.000000e+00> : vector<2x128xf32>
    %77 = tpu.matmul %74, %76, %cst_40 {dimension_numbers = #tpu.dot_dimension_numbers<[1], [0], [0], [1], [0, 0, 1, 1], [], []>} : vector<2x100xf32>, vector<100x128xf32>, vector<2x128xf32> -> vector<2x128xf32>
    %78 = arith.addf %72, %77 : vector<2x128xf32>
    %79 = vector.extract_strided_slice %5 {offsets = [0, 12, 0], sizes = [2, 1, 100], strides = [1, 1, 1]} : vector<2x16x100xf32> to vector<2x1x100xf32>
    %80 = vector.shape_cast %79 : vector<2x1x100xf32> to vector<2x100xf32>
    %c12 = arith.constant 12 : index
    %c0_41 = arith.constant 0 : index
    %c0_42 = arith.constant 0 : index
    %81 = vector.load %arg4[%c12, %c0_41, %c0_42] : memref<16x100x128xf32, #tpu.memory_space<vmem>>, vector<1x100x128xf32>
    %82 = vector.shape_cast %81 : vector<1x100x128xf32> to vector<100x128xf32>
    %cst_43 = arith.constant dense<0.000000e+00> : vector<2x128xf32>
    %83 = tpu.matmul %80, %82, %cst_43 {dimension_numbers = #tpu.dot_dimension_numbers<[1], [0], [0], [1], [0, 0, 1, 1], [], []>} : vector<2x100xf32>, vector<100x128xf32>, vector<2x128xf32> -> vector<2x128xf32>
    %84 = arith.addf %78, %83 : vector<2x128xf32>
    %85 = vector.extract_strided_slice %5 {offsets = [0, 13, 0], sizes = [2, 1, 100], strides = [1, 1, 1]} : vector<2x16x100xf32> to vector<2x1x100xf32>
    %86 = vector.shape_cast %85 : vector<2x1x100xf32> to vector<2x100xf32>
    %c13 = arith.constant 13 : index
    %c0_44 = arith.constant 0 : index
    %c0_45 = arith.constant 0 : index
    %87 = vector.load %arg4[%c13, %c0_44, %c0_45] : memref<16x100x128xf32, #tpu.memory_space<vmem>>, vector<1x100x128xf32>
    %88 = vector.shape_cast %87 : vector<1x100x128xf32> to vector<100x128xf32>
    %cst_46 = arith.constant dense<0.000000e+00> : vector<2x128xf32>
    %89 = tpu.matmul %86, %88, %cst_46 {dimension_numbers = #tpu.dot_dimension_numbers<[1], [0], [0], [1], [0, 0, 1, 1], [], []>} : vector<2x100xf32>, vector<100x128xf32>, vector<2x128xf32> -> vector<2x128xf32>
    %90 = arith.addf %84, %89 : vector<2x128xf32>
    %91 = vector.extract_strided_slice %5 {offsets = [0, 14, 0], sizes = [2, 1, 100], strides = [1, 1, 1]} : vector<2x16x100xf32> to vector<2x1x100xf32>
    %92 = vector.shape_cast %91 : vector<2x1x100xf32> to vector<2x100xf32>
    %c14 = arith.constant 14 : index
    %c0_47 = arith.constant 0 : index
    %c0_48 = arith.constant 0 : index
    %93 = vector.load %arg4[%c14, %c0_47, %c0_48] : memref<16x100x128xf32, #tpu.memory_space<vmem>>, vector<1x100x128xf32>
    %94 = vector.shape_cast %93 : vector<1x100x128xf32> to vector<100x128xf32>
    %cst_49 = arith.constant dense<0.000000e+00> : vector<2x128xf32>
    %95 = tpu.matmul %92, %94, %cst_49 {dimension_numbers = #tpu.dot_dimension_numbers<[1], [0], [0], [1], [0, 0, 1, 1], [], []>} : vector<2x100xf32>, vector<100x128xf32>, vector<2x128xf32> -> vector<2x128xf32>
    %96 = arith.addf %90, %95 : vector<2x128xf32>
    %97 = vector.extract_strided_slice %5 {offsets = [0, 15, 0], sizes = [2, 1, 100], strides = [1, 1, 1]} : vector<2x16x100xf32> to vector<2x1x100xf32>
    %98 = vector.shape_cast %97 : vector<2x1x100xf32> to vector<2x100xf32>
    %c15 = arith.constant 15 : index
    %c0_50 = arith.constant 0 : index
    %c0_51 = arith.constant 0 : index
    %99 = vector.load %arg4[%c15, %c0_50, %c0_51] : memref<16x100x128xf32, #tpu.memory_space<vmem>>, vector<1x100x128xf32>
    %100 = vector.shape_cast %99 : vector<1x100x128xf32> to vector<100x128xf32>
    %cst_52 = arith.constant dense<0.000000e+00> : vector<2x128xf32>
    %101 = tpu.matmul %98, %100, %cst_52 {dimension_numbers = #tpu.dot_dimension_numbers<[1], [0], [0], [1], [0, 0, 1, 1], [], []>} : vector<2x100xf32>, vector<100x128xf32>, vector<2x128xf32> -> vector<2x128xf32>
    %102 = arith.addf %96, %101 : vector<2x128xf32>
    %c0_53 = arith.constant 0 : index
    %c0_54 = arith.constant 0 : index
    %103 = vector.load %arg6[%c0_53, %c0_54] : memref<2x128xf32, #tpu.memory_space<vmem>>, vector<2x128xf32>
    tpu.vector_store %arg6[%c0_53, %c0_54], %102 {strides = array<i32>} : memref<2x128xf32, #tpu.memory_space<vmem>>, vector<2x128xf32>,
    %c3_i32 = arith.constant 3 : i32
    %104 = arith.cmpi eq, %arg0, %c3_i32 : i32
    %105 = arith.extui %104 : i1 to i32
    %c0_i32_55 = arith.constant 0 : i32
    %106 = arith.cmpi ne, %105, %c0_i32_55 : i32
    scf.if %106 {
      %c0_56 = arith.constant 0 : index
      %c0_57 = arith.constant 0 : index
      %107 = vector.load %arg6[%c0_56, %c0_57] : memref<2x128xf32, #tpu.memory_space<vmem>>, vector<2x128xf32>
      %cst_58 = arith.constant 0.000000e+00 : f32
      %108 = vector.broadcast %cst_58 : f32 to vector<2x128xf32>
      %109 = arith.maximumf %107, %108 : vector<2x128xf32>
      %c0_59 = arith.constant 0 : index
      %c0_60 = arith.constant 0 : index
      %110 = vector.load %arg6[%c0_59, %c0_60] : memref<2x128xf32, #tpu.memory_space<vmem>>, vector<2x128xf32>
      tpu.vector_store %arg6[%c0_59, %c0_60], %109 {strides = array<i32>} : memref<2x128xf32, #tpu.memory_space<vmem>>, vector<2x128xf32>,
    } else {
    }
    return
  }
  func.func @transform_0(%arg0: i32) -> (i32, i32, i32) {
    %c0_i32 = arith.constant 0 : i32
    %c0_i32_0 = arith.constant 0 : i32
    %c0_i32_1 = arith.constant 0 : i32
    %c0_i32_2 = arith.constant 0 : i32
    return %c0_i32, %c0_i32_0, %c0_i32_1 : i32, i32, i32
  }
  func.func @transform_1(%arg0: i32) -> (i32, i32) {
    %c0_i32 = arith.constant 0 : i32
    %c0_i32_0 = arith.constant 0 : i32
    %c0_i32_1 = arith.constant 0 : i32
    return %c0_i32, %c0_i32_0 : i32, i32
  }
  func.func @transform_2(%arg0: i32) -> (i32, i32) {
    %c0_i32 = arith.constant 0 : i32
    %c0_i32_0 = arith.constant 0 : i32
    %c0_i32_1 = arith.constant 0 : i32
    return %c0_i32, %c0_i32_0 : i32, i32
  }
  func.func @transform_3(%arg0: i32) -> (i32, i32, i32) {
    %c0_i32 = arith.constant 0 : i32
    %c0_i32_0 = arith.constant 0 : i32
    %c0_i32_1 = arith.constant 0 : i32
    return %arg0, %c0_i32, %c0_i32_0 : i32, i32, i32
  }
  func.func @transform_4(%arg0: i32) -> (i32, i32) {
    %c0_i32 = arith.constant 0 : i32
    %c0_i32_0 = arith.constant 0 : i32
    %c0_i32_1 = arith.constant 0 : i32
    return %c0_i32, %c0_i32_0 : i32, i32
  }
  func.func @transform_5(%arg0: i32) -> (i32, i32) {
    %c0_i32 = arith.constant 0 : i32
    %c0_i32_0 = arith.constant 0 : i32
    %c0_i32_1 = arith.constant 0 : i32
    return %c0_i32, %c0_i32_0 : i32, i32
  }
}

</mosaic_0001>

<llo_original>
// kernel: epsilon_c_forward.1
$region0: #{epsilon_c_forward.1}
  #allocation0 [shape = 'u32[]', space=smem, size = 0x4, offset = 0x4, fixed_abs, tag = 'smem constant byte address 0x4 - core index']
  #allocation1 [shape = 'u32[72,128]{1,0:T(1,128)}', space=vmem, size = 0x9000, scoped, tag = 'internal scratch']
  #allocation2 [shape = 'f32[4,2,16,100]{3,2,1,0:T(8,128)}', space=vmem, size = 0x10000, scoped, tag = 'scratch operand']
  %s0 = inlined_call_operand.vmem [shape: f32[2,4,128], index: 0, kind: input, shape index: {}]
  %s1 = inlined_call_operand.vmem [shape: f32[64,36], index: 1, kind: input, shape index: {}]
  %s2 = inlined_call_operand.vmem [shape: f32[64,1], index: 2, kind: input, shape index: {}]
  %s3 = inlined_call_operand.vmem [shape: f32[64,100,128], index: 3, kind: input, shape index: {}]
  %s4 = inlined_call_operand.vmem [shape: f32[1,128], index: 4, kind: input, shape index: {}]
  %s5 = inlined_call_operand.hbm [shape: f32[2,128], index: 5, kind: output, shape index: {}]
  %s6 = sld [smem:[#allocation0]]
  $region61: #{epsilon_c_forward.1} parent=0
    _
  %s8 = ssub.s32 1, %s6
  %s9 = scalar_select 0, %s8, %s6
  $region1: #{epsilon_c_forward.1} parent=0
    #allocation3 [shape = 'u8[1024]{0}', space=vmem, size = 0x400, scoped, tag = 'output window, operand 0, single buffered']
    #allocation4 [shape = 's32[2]{0}', space=sflag, size = 0x8, scoped, tag = 'scoped memory for epsilon_c_forward.1']
    %10 = vsyncpa [#allocation4], 0
    loop: start=0, step=1, limit=6
    $region2: #{epsilon_c_forward.1} parent=1 // loop_pre_header
      _
    $region3: #{epsilon_c_forward.1} parent=1 // loop_header
      %s12 = sphi 0, %s16
      %p13 = scmp.ge.s32.totalorder %s12, 6
      %s20 = sphi 0, %s20
      %s22 = sphi 0, %s20
      %s23 = sphi 0, %s22
      %s37 = sphi 0, %s23
      %s41 = sphi 0, %s41
      %s43 = sphi 0, %s41
      %s44 = sphi 0, %s43
      %s58 = sphi 0, %s44
      %s62 = sphi 0, %s62
      %s64 = sphi 0, %s62
      %s65 = sphi 0, %s64
      %s79 = sphi 0, %s65
      %s85 = sphi 0, %s87
      %s88 = sphi 0, %s85
      %s89 = sphi 0, %s88
      %s105 = sphi 0, %s89
      %s109 = sphi 0, %s109
      %s111 = sphi 0, %s109
      %s112 = sphi 0, %s111
      %s126 = sphi 0, %s112
      %s130 = sphi 0, %s130
      %s132 = sphi 0, %s130
      %s133 = sphi 0, %s132
      %s147 = sphi 0, %s133
    $region4: #{epsilon_c_forward.1} parent=1 // loop_header_branch
      %15 = sbr.rel (%p13) target = $region8
    $region5: #{epsilon_c_forward.1} parent=1 // loop_body
      %s17 = ssub.s32 %s12, 1
      %s18 = ssub.s32 %s12, 2
      %s19 = sadd.s32 %s12, 1
      %s21 = sadd.s32 %s20, 1
      %p24 = scmp.eq.s32.totalorder %s12, 3
      %p25 = scmp.ne.s32.totalorder %s20, %s22
      %p26 = scmp.eq.s32.totalorder %s12, 0
      %p27 = por %p25, %p26
      %p28 = scmp.ne.s32.totalorder %s20, %s22
      %p29 = scmp.eq.s32.totalorder %s17, 3
      %p30 = por %p28, %p29
      %p31 = scmp.ne.s32.totalorder %s22, %s23
      %p32 = scmp.eq.s32.totalorder %s17, 0
      %p33 = por %p31, %p32
      %p34 = scmp.ne.s32.totalorder %s22, %s23
      %p35 = scmp.eq.s32.totalorder %s18, 3
      %p36 = por %p34, %p35
      %p38 = scmp.ne.s32.totalorder %s23, %s37
      %p39 = scmp.eq.s32.totalorder %s18, 0
      %p40 = por %p38, %p39
      %s42 = sadd.s32 %s41, 1
      %p45 = scmp.eq.s32.totalorder %s12, 3
      %p46 = scmp.ne.s32.totalorder %s41, %s43
      %p47 = scmp.eq.s32.totalorder %s12, 0
      %p48 = por %p46, %p47
      %p49 = scmp.ne.s32.totalorder %s41, %s43
      %p50 = scmp.eq.s32.totalorder %s17, 3
      %p51 = por %p49, %p50
      %p52 = scmp.ne.s32.totalorder %s43, %s44
      %p53 = scmp.eq.s32.totalorder %s17, 0
      %p54 = por %p52, %p53
      %p55 = scmp.ne.s32.totalorder %s43, %s44
      %p56 = scmp.eq.s32.totalorder %s18, 3
      %p57 = por %p55, %p56
      %p59 = scmp.ne.s32.totalorder %s44, %s58
      %p60 = scmp.eq.s32.totalorder %s18, 0
      %p61 = por %p59, %p60
      %s63 = sadd.s32 %s62, 1
      %p66 = scmp.eq.s32.totalorder %s12, 3
      %p67 = scmp.ne.s32.totalorder %s62, %s64
      %p68 = scmp.eq.s32.totalorder %s12, 0
      %p69 = por %p67, %p68
      %p70 = scmp.ne.s32.totalorder %s62, %s64
      %p71 = scmp.eq.s32.totalorder %s17, 3
      %p72 = por %p70, %p71
      %p73 = scmp.ne.s32.totalorder %s64, %s65
      %p74 = scmp.eq.s32.totalorder %s17, 0
      %p75 = por %p73, %p74
      %p76 = scmp.ne.s32.totalorder %s64, %s65
      %p77 = scmp.eq.s32.totalorder %s18, 3
      %p78 = por %p76, %p77
      %p80 = scmp.ne.s32.totalorder %s65, %s79
      %p81 = scmp.eq.s32.totalorder %s18, 0
      %p82 = por %p80, %p81
      %s83 = ssub.s32 %s12, %s19
      %p84 = scmp.eq.s32.totalorder %s83, 0
      %s86 = sadd.s32 %s85, 1
      %s87 = scalar_select %p84, %s85, %s86
      %p90 = pneg %p84
      %p91 = scmp.eq.s32.totalorder %s12, 3
      %p92 = por %p90, %p91
      %p93 = scmp.ne.s32.totalorder %s85, %s88
      %p94 = scmp.eq.s32.totalorder %s12, 0
      %p95 = por %p93, %p94
      %p96 = scmp.ne.s32.totalorder %s85, %s88
      %p97 = scmp.eq.s32.totalorder %s17, 3
      %p98 = por %p96, %p97
      %p99 = scmp.ne.s32.totalorder %s88, %s89
      %p100 = scmp.eq.s32.totalorder %s17, 0
      %p101 = por %p99, %p100
      %p102 = scmp.ne.s32.totalorder %s88, %s89
      %p103 = scmp.eq.s32.totalorder %s18, 3
      %p104 = por %p102, %p103
      %p106 = scmp.ne.s32.totalorder %s89, %s105
      %p107 = scmp.eq.s32.totalorder %s18, 0
      %p108 = por %p106, %p107
      %s110 = sadd.s32 %s109, 1
      %p113 = scmp.eq.s32.totalorder %s12, 3
      %p114 = scmp.ne.s32.totalorder %s109, %s111
      %p115 = scmp.eq.s32.totalorder %s12, 0
      %p116 = por %p114, %p115
      %p117 = scmp.ne.s32.totalorder %s109, %s111
      %p118 = scmp.eq.s32.totalorder %s17, 3
      %p119 = por %p117, %p118
      %p120 = scmp.ne.s32.totalorder %s111, %s112
      %p121 = scmp.eq.s32.totalorder %s17, 0
      %p122 = por %p120, %p121
      %p123 = scmp.ne.s32.totalorder %s111, %s112
      %p124 = scmp.eq.s32.totalorder %s18, 3
      %p125 = por %p123, %p124
      %p127 = scmp.ne.s32.totalorder %s112, %s126
      %p128 = scmp.eq.s32.totalorder %s18, 0
      %p129 = por %p127, %p128
      %s131 = sadd.s32 %s130, 1
      %p134 = scmp.eq.s32.totalorder %s12, 3
      %p135 = scmp.ne.s32.totalorder %s130, %s132
      %p136 = scmp.eq.s32.totalorder %s12, 0
      %p137 = por %p135, %p136
      %p138 = scmp.ne.s32.totalorder %s130, %s132
      %p139 = scmp.eq.s32.totalorder %s17, 3
      %p140 = por %p138, %p139
      %p141 = scmp.ne.s32.totalorder %s132, %s133
      %p142 = scmp.eq.s32.totalorder %s17, 0
      %p143 = por %p141, %p142
      %p144 = scmp.ne.s32.totalorder %s132, %s133
      %p145 = scmp.eq.s32.totalorder %s18, 3
      %p146 = por %p144, %p145
      %p148 = scmp.ne.s32.totalorder %s133, %s147
      %p149 = scmp.eq.s32.totalorder %s18, 0
      %p150 = por %p148, %p149
      %p151 = scmp.le.s32.totalorder 1, %s12
      %p152 = scmp.lt.s32.totalorder %s12, 5
      %p153 = pnand %p151, %p152
      %p154 = pneg %p153
      // Predicated region
      $region9: #{epsilon_c_forward.1} parent=5 // pred_check
        _
      $region10: #{epsilon_c_forward.1} parent=5 // pred_check_branch
        %156 = sbr.rel (%p153) target = $region12
      $region11: #{epsilon_c_forward.1} parent=5 // pred_region
        %s157 = ssub.s32 %s12, 1
        // Predicated region
        $region13: #{epsilon_c_forward.1} parent=11 // pred_check
          %p158 = pneg %p33
        $region14: #{epsilon_c_forward.1} parent=11 // pred_check_branch
          %160 = sbr.rel (%p158) target = $region16
        $region15: #{epsilon_c_forward.1} parent=11 // pred_region
          _
        $region16: #{epsilon_c_forward.1} parent=11 // pred_fallthru
          _
        // Predicated region
        $region17: #{epsilon_c_forward.1} parent=11 // pred_check
          %p161 = pneg %p54
        $region18: #{epsilon_c_forward.1} parent=11 // pred_check_branch
          %163 = sbr.rel (%p161) target = $region20
        $region19: #{epsilon_c_forward.1} parent=11 // pred_region
          _
        $region20: #{epsilon_c_forward.1} parent=11 // pred_fallthru
          _
        // Predicated region
        $region21: #{epsilon_c_forward.1} parent=11 // pred_check
          %p164 = pneg %p75
        $region22: #{epsilon_c_forward.1} parent=11 // pred_check_branch
          %166 = sbr.rel (%p164) target = $region24
        $region23: #{epsilon_c_forward.1} parent=11 // pred_region
          _
        $region24: #{epsilon_c_forward.1} parent=11 // pred_fallthru
          _
        // Predicated region
        $region25: #{epsilon_c_forward.1} parent=11 // pred_check
          %p167 = pneg %p122
        $region26: #{epsilon_c_forward.1} parent=11 // pred_check_branch
          %169 = sbr.rel (%p167) target = $region28
        $region27: #{epsilon_c_forward.1} parent=11 // pred_region
          _
        $region28: #{epsilon_c_forward.1} parent=11 // pred_fallthru
          _
      $region12: #{epsilon_c_forward.1} parent=5 // pred_fallthru
        _
      %p170 = scmp.lt.s32.totalorder %s12, 4
      // Predicated region
      $region29: #{epsilon_c_forward.1} parent=5 // pred_check
        %p171 = pneg %p170
      $region30: #{epsilon_c_forward.1} parent=5 // pred_check_branch
        %173 = sbr.rel (%p171) target = $region32
      $region31: #{epsilon_c_forward.1} parent=5 // pred_region
        // Predicated region
        $region33: #{epsilon_c_forward.1} parent=31 // pred_check
          %p174 = pneg %p95
        $region34: #{epsilon_c_forward.1} parent=31 // pred_check_branch
          %176 = sbr.rel (%p174) target = $region36
        $region35: #{epsilon_c_forward.1} parent=31 // pred_region
          %s177 = smul.u32 16, %s12
          %p178 = scmp.lt.s32.totalorder %s177, 63
          %s179 = scalar_select %p178, %s177, 63
          %s180 = smul.addr %s179, 13
          %s181 = smul.addr %s180, 8
          %s182 = scalar_lea.vmem %s3, %s181
          %s183 = smul.u32 16, %s12
        $region36: #{epsilon_c_forward.1} parent=31 // pred_fallthru
          _
      $region32: #{epsilon_c_forward.1} parent=5 // pred_fallthru
        _
      %p184 = scmp.le.s32.totalorder 1, %s12
      %p185 = scmp.lt.s32.totalorder %s12, 5
      %p186 = pnand %p184, %p185
      %p187 = pneg %p186
      // Predicated region
      $region37: #{epsilon_c_forward.1} parent=5 // pred_check
        _
      $region38: #{epsilon_c_forward.1} parent=5 // pred_check_branch
        %189 = sbr.rel (%p186) target = $region40
      $region39: #{epsilon_c_forward.1} parent=5 // pred_region
        %s190 = ssub.s32 %s12, 1
        %p191 = pneg %p33
        %p192 = pneg %p30
        %p193 = pneg %p54
        %p194 = pneg %p51
        %p195 = pneg %p75
        %p196 = pneg %p72
        %s197 = smul.u32 16, %s17
        %p198 = scmp.lt.s32.totalorder %s197, 63
        %s199 = scalar_select %p198, %s197, 63
        %s200 = smul.addr %s199, 13
        %s201 = smul.addr %s200, 8
        %s202 = scalar_lea.vmem %s3, %s201
        %p203 = pneg %p101
        %p204 = pneg %p98
        %p205 = pneg %p122
        %p206 = pneg %p119
        %p207 = pneg %p143
        %p208 = pneg %p140
        %s209 = smul.u32 16, %s17
        %p210 = scmp.lt.s32.totalorder %s209, 63
        %s211 = scalar_select %p210, %s209, 63
        %s212 = smul.addr %s211, 13
        %s213 = smul.addr %s212, 8
        %s214 = scalar_lea.vmem %s3, %s213
        %s215 = smul.u32 16, %s17
        %p216 = scmp.eq.s32.totalorder %s17, 0
        // Predicated region
        $region41: #{epsilon_c_forward.1} parent=39 // pred_check
          %p217 = pneg %p216
        $region42: #{epsilon_c_forward.1} parent=39 // pred_check_branch
          %219 = sbr.rel (%p217) target = $region44
        $region43: #{epsilon_c_forward.1} parent=39 // pred_region
          %v220 = vld [vmem:[%s0] sm:$0xf]
          %v221 = vld [vmem:[%s0 + $0x4] sm:$0xf]
          %v222 = vld [vmem:[%s1] sm:$0xff]
          %v223 = vld [vmem:[%s1 + $0x8] sm:$0xff]
          %v224 = vld [vmem:[%s1 + $0x10] sm:$0xff]
          %v225 = vld [vmem:[%s1 + $0x18] sm:$0xff]
          %v226 = vld [vmem:[%s1 + $0x20] sm:$0xff]
          %v227 = vld [vmem:[%s1 + $0x28] sm:$0xff]
          %v228 = vld [vmem:[%s1 + $0x30] sm:$0xff]
          %v229 = vld [vmem:[%s1 + $0x38] sm:$0xff]
          %v230 = vlaneseq
          %v231 = vand.u32 %v230, 127
          %vm232 = vcmp.lt.s32.totalorder %v231, 0
          %v233 = vsub.s32 0, %v231
          %v234 = vsel %vm232, %v233, %v231
          %v235 = vand.u32 %v234, 65535
          %v236 = vshrl.u32 %v234, 16
          %v238 = vmul.u32 %v235, 52429
          %v239 = vmul.u32 %v235, 52428
          %v240 = vmul.u32 %v236, 52429
          %v241 = vmul.u32 %v236, 52428
          %v242 = vshll.u32 %v239, 16
          %v243 = vshrl.u32 %v239, 16
          %v244 = vshll.u32 %v240, 16
          %v245 = vshrl.u32 %v240, 16
          %vm246 = vc.u32 %v238, %v242
          %v247 = vsel %vm246, 1, 0
          %v248 = vadd.s32 %v238, %v242
          %v249 = vadd.s32 %v241, %v247
          %vm250 = vc.u32 %v248, %v244
          %v251 = vsel %vm250, 1, 0
          %v252 = vadd.s32 %v248, %v244
          %v253 = vadd.s32 %v249, %v251
          %v254 = vadd.s32 %v253, %v243
          %v255 = vadd.s32 %v254, %v245
          %v256 = vshrl.u32 %v255, 3
          %v257 = vmul.u32 %v256, 10
          %v258 = vsub.s32 %v234, %v257
          %v259 = vsub.s32 0, %v258
          %v260 = vsel %vm232, %v259, %v258
          %vm261 = vcmp.ne.s32.totalorder %v260, 0
          %vm262 = vcmp.lt.s32.totalorder %v260, 0
          %vm263 = vmand %vm262, %vm261
          %v264 = vadd.s32 %v260, 10
          %v265 = vsel %vm263, %v264, %v260
          %vm266 = vcmp.ge.s32.totalorder %v265, 1
          %vm267 = vcmp.le.s32.totalorder %v265, 8
          %v268 = vsel %vm266, %v220, 0.0
          %277 = vrot.lane.b32.xlu0 %v222, 124
          %v278 = vpop.permute.xlu0 %277
          %279 = vrot.lane.b32.xlu0 %v223, 124
          %v280 = vpop.permute.xlu0 %279
          %281 = vrot.lane.b32.xlu0 %v224, 124
          %v282 = vpop.permute.xlu0 %281
          %283 = vrot.lane.b32.xlu0 %v225, 124
          %v284 = vpop.permute.xlu0 %283
          %285 = vrot.lane.b32.xlu0 %v226, 124
          %v286 = vpop.permute.xlu0 %285
          %287 = vrot.lane.b32.xlu0 %v227, 124
          %v288 = vpop.permute.xlu0 %287
          %289 = vrot.lane.b32.xlu0 %v228, 124
          %v290 = vpop.permute.xlu0 %289
          %291 = vrot.lane.b32.xlu0 %v229, 124
          %v292 = vpop.permute.xlu0 %291
          %294 = vrot.lane.b32.xlu0 %v220, 127
          %v295 = vpop.permute.xlu0 %294
          %vm296 = vcmask 31744
          %v297 = vsel %vm296, %v278, 0
          %v299 = vsel %vm296, %v280, 0
          %v301 = vsel %vm296, %v282, 0
          %v303 = vsel %vm296, %v284, 0
          %v305 = vsel %vm296, %v286, 0
          %v307 = vsel %vm296, %v288, 0
          %v309 = vsel %vm296, %v290, 0
          %v311 = vsel %vm296, %v292, 0
          %vm313 = vcmask 1043456
          %v314 = vsel %vm313, %v295, 0
          %316 = vmatpush.msra.mxu0 0.0
          %317 = vmatpush.msra.mxu0 0.0
          %318 = vmatpush.msra.mxu0 0.0
          %319 = vmatpush.msra.mxu0 0.0
          %320 = vmatpush.msra.mxu0 0.0
          %321 = vmatpush.msra.mxu0 0.0
          %322 = vmatpush.msra.mxu0 0.0
          %323 = vmatpush.msra.mxu0 0.0
          %324 = vmatpush.msra.mxu0 0.0
          %325 = vmatpush.msra.mxu0 0.0
          %326 = vmatpush.msra.mxu0 0.0
          %327 = vmatpush.msra.mxu0 0.0
          %328 = vmatpush.msra.mxu0 0.0
          %329 = vmatpush.msra.mxu0 0.0
          %330 = vmatpush.msra.mxu0 0.0
          %331 = vmatpush.msra.mxu0 %v314
          %332 = vmatmul.f32.gmra.mxu0 %v297
          %v333 = vpop.f32.mrf.mxu0
          %v334 = vadd.f32 0.0, %v333
          %335 = vmatmul.f32.gmra.mxu0 %v299
          %v336 = vpop.f32.mrf.mxu0
          %v337 = vadd.f32 0.0, %v336
          %338 = vmatmul.f32.gmra.mxu0 %v301
          %v339 = vpop.f32.mrf.mxu0
          %v340 = vadd.f32 0.0, %v339
          %341 = vmatmul.f32.gmra.mxu0 %v303
          %v342 = vpop.f32.mrf.mxu0
          %v343 = vadd.f32 0.0, %v342
          %344 = vmatmul.f32.gmra.mxu0 %v305
          %v345 = vpop.f32.mrf.mxu0
          %v346 = vadd.f32 0.0, %v345
          %347 = vmatmul.f32.gmra.mxu0 %v307
          %v348 = vpop.f32.mrf.mxu0
          %v349 = vadd.f32 0.0, %v348
          %350 = vmatmul.f32.gmra.mxu0 %v309
          %v351 = vpop.f32.mrf.mxu0
          %v352 = vadd.f32 0.0, %v351
          %353 = vmatmul.f32.gmra.mxu0 %v311
          %v354 = vpop.f32.mrf.mxu0
          %v355 = vadd.f32 0.0, %v354
          %356 = vdwg.mxu0
          %v357 = vsel %vm296, %v222, 0
          %v359 = vsel %vm296, %v223, 0
          %v361 = vsel %vm296, %v224, 0
          %v363 = vsel %vm296, %v225, 0
          %v365 = vsel %vm296, %v226, 0
          %v367 = vsel %vm296, %v227, 0
          %v369 = vsel %vm296, %v228, 0
          %v371 = vsel %vm296, %v229, 0
          %v374 = vsel %vm313, %v268, 0
          %376 = vmatpush.msra.mxu0 0.0
          %377 = vmatpush.msra.mxu0 0.0
          %378 = vmatpush.msra.mxu0 0.0
          %379 = vmatpush.msra.mxu0 0.0
          %380 = vmatpush.msra.mxu0 0.0
          %381 = vmatpush.msra.mxu0 0.0
          %382 = vmatpush.msra.mxu0 0.0
          %383 = vmatpush.msra.mxu0 0.0
          %384 = vmatpush.msra.mxu0 0.0
          %385 = vmatpush.msra.mxu0 0.0
          %386 = vmatpush.msra.mxu0 0.0
          %387 = vmatpush.msra.mxu0 0.0
          %388 = vmatpush.msra.mxu0 0.0
          %389 = vmatpush.msra.mxu0 0.0
          %390 = vmatpush.msra.mxu0 0.0
          %391 = vmatpush.msra.mxu0 %v374
          %392 = vmatmul.f32.gmra.mxu0 %v357
          %v393 = vpop.f32.mrf.mxu0
          %v394 = vadd.f32 %v334, %v393
          %395 = vmatmul.f32.gmra.mxu0 %v359
          %v396 = vpop.f32.mrf.mxu0
          %v397 = vadd.f32 %v337, %v396
          %398 = vmatmul.f32.gmra.mxu0 %v361
          %v399 = vpop.f32.mrf.mxu0
          %v400 = vadd.f32 %v340, %v399
          %401 = vmatmul.f32.gmra.mxu0 %v363
          %v402 = vpop.f32.mrf.mxu0
          %v403 = vadd.f32 %v343, %v402
          %404 = vmatmul.f32.gmra.mxu0 %v365
          %v405 = vpop.f32.mrf.mxu0
          %v406 = vadd.f32 %v346, %v405
          %407 = vmatmul.f32.gmra.mxu0 %v367
          %v408 = vpop.f32.mrf.mxu0
          %v409 = vadd.f32 %v349, %v408
          %410 = vmatmul.f32.gmra.mxu0 %v369
          %v411 = vpop.f32.mrf.mxu0
          %v412 = vadd.f32 %v352, %v411
          %413 = vmatmul.f32.gmra.mxu0 %v371
          %v414 = vpop.f32.mrf.mxu0
          %v415 = vadd.f32 %v355, %v414
          %416 = vdwg.mxu0
          %417 = vrot.lane.b32.xlu0 %v220, 126
          %v418 = vpop.permute.xlu0 %417
          %v420 = vsel %vm267, %v418, 0.0
          %421 = vrot.lane.b32.xlu0 %v222, 120
          %v422 = vpop.permute.xlu0 %421
          %423 = vrot.lane.b32.xlu0 %v223, 120
          %v424 = vpop.permute.xlu0 %423
          %425 = vrot.lane.b32.xlu0 %v224, 120
          %v426 = vpop.permute.xlu0 %425
          %427 = vrot.lane.b32.xlu0 %v225, 120
          %v428 = vpop.permute.xlu0 %427
          %429 = vrot.lane.b32.xlu0 %v226, 120
          %v430 = vpop.permute.xlu0 %429
          %431 = vrot.lane.b32.xlu0 %v227, 120
          %v432 = vpop.permute.xlu0 %431
          %433 = vrot.lane.b32.xlu0 %v228, 120
          %v434 = vpop.permute.xlu0 %433
          %435 = vrot.lane.b32.xlu0 %v229, 120
          %v436 = vpop.permute.xlu0 %435
          %v437 = vsel %vm296, %v422, 0
          %v439 = vsel %vm296, %v424, 0
          %v441 = vsel %vm296, %v426, 0
          %v443 = vsel %vm296, %v428, 0
          %v445 = vsel %vm296, %v430, 0
          %v447 = vsel %vm296, %v432, 0
          %v449 = vsel %vm296, %v434, 0
          %v451 = vsel %vm296, %v436, 0
          %v454 = vsel %vm313, %v420, 0
          %456 = vmatpush.msra.mxu0 0.0
          %457 = vmatpush.msra.mxu0 0.0
          %458 = vmatpush.msra.mxu0 0.0
          %459 = vmatpush.msra.mxu0 0.0
          %460 = vmatpush.msra.mxu0 0.0
          %461 = vmatpush.msra.mxu0 0.0
          %462 = vmatpush.msra.mxu0 0.0
          %463 = vmatpush.msra.mxu0 0.0
          %464 = vmatpush.msra.mxu0 0.0
          %465 = vmatpush.msra.mxu0 0.0
          %466 = vmatpush.msra.mxu0 0.0
          %467 = vmatpush.msra.mxu0 0.0
          %468 = vmatpush.msra.mxu0 0.0
          %469 = vmatpush.msra.mxu0 0.0
          %470 = vmatpush.msra.mxu0 0.0
          %471 = vmatpush.msra.mxu0 %v454
          %472 = vmatmul.f32.gmra.mxu0 %v437
          %v473 = vpop.f32.mrf.mxu0
          %v474 = vadd.f32 0.0, %v473
          %475 = vmatmul.f32.gmra.mxu0 %v439
          %v476 = vpop.f32.mrf.mxu0
          %v477 = vadd.f32 0.0, %v476
          %478 = vmatmul.f32.gmra.mxu0 %v441
          %v479 = vpop.f32.mrf.mxu0
          %v480 = vadd.f32 0.0, %v479
          %481 = vmatmul.f32.gmra.mxu0 %v443
          %v482 = vpop.f32.mrf.mxu0
          %v483 = vadd.f32 0.0, %v482
          %484 = vmatmul.f32.gmra.mxu0 %v445
          %v485 = vpop.f32.mrf.mxu0
          %v486 = vadd.f32 0.0, %v485
          %487 = vmatmul.f32.gmra.mxu0 %v447
          %v488 = vpop.f32.mrf.mxu0
          %v489 = vadd.f32 0.0, %v488
          %490 = vmatmul.f32.gmra.mxu0 %v449
          %v491 = vpop.f32.mrf.mxu0
          %v492 = vadd.f32 0.0, %v491
          %493 = vmatmul.f32.gmra.mxu0 %v451
          %v494 = vpop.f32.mrf.mxu0
          %v495 = vadd.f32 0.0, %v494
          %496 = vdwg.mxu0
          %v497 = vadd.f32 %v394, %v474
          %v498 = vadd.f32 %v397, %v477
          %v499 = vadd.f32 %v400, %v480
          %v500 = vadd.f32 %v403, %v483
          %v501 = vadd.f32 %v406, %v486
          %v502 = vadd.f32 %v409, %v489
          %v503 = vadd.f32 %v412, %v492
          %v504 = vadd.f32 %v415, %v495
          %505 = vrot.lane.b32.xlu0 %v220, 118
          %v506 = vpop.permute.xlu0 %505
          %v508 = vsel %vm266, %v506, 0.0
          %509 = vrot.lane.b32.xlu0 %v222, 116
          %v510 = vpop.permute.xlu0 %509
          %511 = vrot.lane.b32.xlu0 %v223, 116
          %v512 = vpop.permute.xlu0 %511
          %513 = vrot.lane.b32.xlu0 %v224, 116
          %v514 = vpop.permute.xlu0 %513
          %515 = vrot.lane.b32.xlu0 %v225, 116
          %v516 = vpop.permute.xlu0 %515
          %517 = vrot.lane.b32.xlu0 %v226, 116
          %v518 = vpop.permute.xlu0 %517
          %519 = vrot.lane.b32.xlu0 %v227, 116
          %v520 = vpop.permute.xlu0 %519
          %521 = vrot.lane.b32.xlu0 %v228, 116
          %v522 = vpop.permute.xlu0 %521
          %523 = vrot.lane.b32.xlu0 %v229, 116
          %v524 = vpop.permute.xlu0 %523
          %v525 = vsel %vm296, %v510, 0
          %v527 = vsel %vm296, %v512, 0
          %v529 = vsel %vm296, %v514, 0
          %v531 = vsel %vm296, %v516, 0
          %v533 = vsel %vm296, %v518, 0
          %v535 = vsel %vm296, %v520, 0
          %v537 = vsel %vm296, %v522, 0
          %v539 = vsel %vm296, %v524, 0
          %v542 = vsel %vm313, %v508, 0
          %544 = vmatpush.msra.mxu0 0.0
          %545 = vmatpush.msra.mxu0 0.0
          %546 = vmatpush.msra.mxu0 0.0
          %547 = vmatpush.msra.mxu0 0.0
          %548 = vmatpush.msra.mxu0 0.0
          %549 = vmatpush.msra.mxu0 0.0
          %550 = vmatpush.msra.mxu0 0.0
          %551 = vmatpush.msra.mxu0 0.0
          %552 = vmatpush.msra.mxu0 0.0
          %553 = vmatpush.msra.mxu0 0.0
          %554 = vmatpush.msra.mxu0 0.0
          %555 = vmatpush.msra.mxu0 0.0
          %556 = vmatpush.msra.mxu0 0.0
          %557 = vmatpush.msra.mxu0 0.0
          %558 = vmatpush.msra.mxu0 0.0
          %559 = vmatpush.msra.mxu0 %v542
          %560 = vmatmul.f32.gmra.mxu0 %v525
          %v561 = vpop.f32.mrf.mxu0
          %v562 = vadd.f32 0.0, %v561
          %563 = vmatmul.f32.gmra.mxu0 %v527
          %v564 = vpop.f32.mrf.mxu0
          %v565 = vadd.f32 0.0, %v564
          %566 = vmatmul.f32.gmra.mxu0 %v529
          %v567 = vpop.f32.mrf.mxu0
          %v568 = vadd.f32 0.0, %v567
          %569 = vmatmul.f32.gmra.mxu0 %v531
          %v570 = vpop.f32.mrf.mxu0
          %v571 = vadd.f32 0.0, %v570
          %572 = vmatmul.f32.gmra.mxu0 %v533
          %v573 = vpop.f32.mrf.mxu0
          %v574 = vadd.f32 0.0, %v573
          %575 = vmatmul.f32.gmra.mxu0 %v535
          %v576 = vpop.f32.mrf.mxu0
          %v577 = vadd.f32 0.0, %v576
          %578 = vmatmul.f32.gmra.mxu0 %v537
          %v579 = vpop.f32.mrf.mxu0
          %v580 = vadd.f32 0.0, %v579
          %581 = vmatmul.f32.gmra.mxu0 %v539
          %v582 = vpop.f32.mrf.mxu0
          %v583 = vadd.f32 0.0, %v582
          %584 = vdwg.mxu0
          %v585 = vadd.f32 %v497, %v562
          %v586 = vadd.f32 %v498, %v565
          %v587 = vadd.f32 %v499, %v568
          %v588 = vadd.f32 %v500, %v571
          %v589 = vadd.f32 %v501, %v574
          %v590 = vadd.f32 %v502, %v577
          %v591 = vadd.f32 %v503, %v580
          %v592 = vadd.f32 %v504, %v583
          %593 = vrot.lane.b32.xlu0 %v222, 112
          %v594 = vpop.permute.xlu0 %593
          %595 = vrot.lane.b32.xlu0 %v223, 112
          %v596 = vpop.permute.xlu0 %595
          %597 = vrot.lane.b32.xlu0 %v224, 112
          %v598 = vpop.permute.xlu0 %597
          %599 = vrot.lane.b32.xlu0 %v225, 112
          %v600 = vpop.permute.xlu0 %599
          %601 = vrot.lane.b32.xlu0 %v226, 112
          %v602 = vpop.permute.xlu0 %601
          %603 = vrot.lane.b32.xlu0 %v227, 112
          %v604 = vpop.permute.xlu0 %603
          %605 = vrot.lane.b32.xlu0 %v228, 112
          %v606 = vpop.permute.xlu0 %605
          %607 = vrot.lane.b32.xlu0 %v229, 112
          %v608 = vpop.permute.xlu0 %607
          %609 = vrot.lane.b32.xlu0 %v220, 117
          %v610 = vpop.permute.xlu0 %609
          %v611 = vsel %vm296, %v594, 0
          %v613 = vsel %vm296, %v596, 0
          %v615 = vsel %vm296, %v598, 0
          %v617 = vsel %vm296, %v600, 0
          %v619 = vsel %vm296, %v602, 0
          %v621 = vsel %vm296, %v604, 0
          %v623 = vsel %vm296, %v606, 0
          %v625 = vsel %vm296, %v608, 0
          %v627 = vsel %vm313, %v610, 0
          %629 = vmatpush.msra.mxu0 0.0
          %630 = vmatpush.msra.mxu0 0.0
          %631 = vmatpush.msra.mxu0 0.0
          %632 = vmatpush.msra.mxu0 0.0
          %633 = vmatpush.msra.mxu0 0.0
          %634 = vmatpush.msra.mxu0 0.0
          %635 = vmatpush.msra.mxu0 0.0
          %636 = vmatpush.msra.mxu0 0.0
          %637 = vmatpush.msra.mxu0 0.0
          %638 = vmatpush.msra.mxu0 0.0
          %639 = vmatpush.msra.mxu0 0.0
          %640 = vmatpush.msra.mxu0 0.0
          %641 = vmatpush.msra.mxu0 0.0
          %642 = vmatpush.msra.mxu0 0.0
          %643 = vmatpush.msra.mxu0 0.0
          %644 = vmatpush.msra.mxu0 %v627
          %645 = vmatmul.f32.gmra.mxu0 %v611
          %v646 = vpop.f32.mrf.mxu0
          %v647 = vadd.f32 0.0, %v646
          %648 = vmatmul.f32.gmra.mxu0 %v613
          %v649 = vpop.f32.mrf.mxu0
          %v650 = vadd.f32 0.0, %v649
          %651 = vmatmul.f32.gmra.mxu0 %v615
          %v652 = vpop.f32.mrf.mxu0
          %v653 = vadd.f32 0.0, %v652
          %654 = vmatmul.f32.gmra.mxu0 %v617
          %v655 = vpop.f32.mrf.mxu0
          %v656 = vadd.f32 0.0, %v655
          %657 = vmatmul.f32.gmra.mxu0 %v619
          %v658 = vpop.f32.mrf.mxu0
          %v659 = vadd.f32 0.0, %v658
          %660 = vmatmul.f32.gmra.mxu0 %v621
          %v661 = vpop.f32.mrf.mxu0
          %v662 = vadd.f32 0.0, %v661
          %663 = vmatmul.f32.gmra.mxu0 %v623
          %v664 = vpop.f32.mrf.mxu0
          %v665 = vadd.f32 0.0, %v664
          %666 = vmatmul.f32.gmra.mxu0 %v625
          %v667 = vpop.f32.mrf.mxu0
          %v668 = vadd.f32 0.0, %v667
          %669 = vdwg.mxu0
          %v670 = vadd.f32 %v585, %v647
          %v671 = vadd.f32 %v586, %v650
          %v672 = vadd.f32 %v587, %v653
          %v673 = vadd.f32 %v588, %v656
          %v674 = vadd.f32 %v589, %v659
          %v675 = vadd.f32 %v590, %v662
          %v676 = vadd.f32 %v591, %v665
          %v677 = vadd.f32 %v592, %v668
          %678 = vrot.lane.b32.xlu0 %v220, 116
          %v679 = vpop.permute.xlu0 %678
          %v681 = vsel %vm267, %v679, 0.0
          %682 = vrot.lane.b32.xlu0 %v222, 108
          %v683 = vpop.permute.xlu0 %682
          %684 = vrot.lane.b32.xlu0 %v223, 108
          %v685 = vpop.permute.xlu0 %684
          %686 = vrot.lane.b32.xlu0 %v224, 108
          %v687 = vpop.permute.xlu0 %686
          %688 = vrot.lane.b32.xlu0 %v225, 108
          %v689 = vpop.permute.xlu0 %688
          %690 = vrot.lane.b32.xlu0 %v226, 108
          %v691 = vpop.permute.xlu0 %690
          %692 = vrot.lane.b32.xlu0 %v227, 108
          %v693 = vpop.permute.xlu0 %692
          %694 = vrot.lane.b32.xlu0 %v228, 108
          %v695 = vpop.permute.xlu0 %694
          %696 = vrot.lane.b32.xlu0 %v229, 108
          %v697 = vpop.permute.xlu0 %696
          %v698 = vsel %vm296, %v683, 0
          %v700 = vsel %vm296, %v685, 0
          %v702 = vsel %vm296, %v687, 0
          %v704 = vsel %vm296, %v689, 0
          %v706 = vsel %vm296, %v691, 0
          %v708 = vsel %vm296, %v693, 0
          %v710 = vsel %vm296, %v695, 0
          %v712 = vsel %vm296, %v697, 0
          %v715 = vsel %vm313, %v681, 0
          %717 = vmatpush.msra.mxu0 0.0
          %718 = vmatpush.msra.mxu0 0.0
          %719 = vmatpush.msra.mxu0 0.0
          %720 = vmatpush.msra.mxu0 0.0
          %721 = vmatpush.msra.mxu0 0.0
          %722 = vmatpush.msra.mxu0 0.0
          %723 = vmatpush.msra.mxu0 0.0
          %724 = vmatpush.msra.mxu0 0.0
          %725 = vmatpush.msra.mxu0 0.0
          %726 = vmatpush.msra.mxu0 0.0
          %727 = vmatpush.msra.mxu0 0.0
          %728 = vmatpush.msra.mxu0 0.0
          %729 = vmatpush.msra.mxu0 0.0
          %730 = vmatpush.msra.mxu0 0.0
          %731 = vmatpush.msra.mxu0 0.0
          %732 = vmatpush.msra.mxu0 %v715
          %733 = vmatmul.f32.gmra.mxu0 %v698
          %v734 = vpop.f32.mrf.mxu0
          %v735 = vadd.f32 0.0, %v734
          %736 = vmatmul.f32.gmra.mxu0 %v700
          %v737 = vpop.f32.mrf.mxu0
          %v738 = vadd.f32 0.0, %v737
          %739 = vmatmul.f32.gmra.mxu0 %v702
          %v740 = vpop.f32.mrf.mxu0
          %v741 = vadd.f32 0.0, %v740
          %742 = vmatmul.f32.gmra.mxu0 %v704
          %v743 = vpop.f32.mrf.mxu0
          %v744 = vadd.f32 0.0, %v743
          %745 = vmatmul.f32.gmra.mxu0 %v706
          %v746 = vpop.f32.mrf.mxu0
          %v747 = vadd.f32 0.0, %v746
          %748 = vmatmul.f32.gmra.mxu0 %v708
          %v749 = vpop.f32.mrf.mxu0
          %v750 = vadd.f32 0.0, %v749
          %751 = vmatmul.f32.gmra.mxu0 %v710
          %v752 = vpop.f32.mrf.mxu0
          %v753 = vadd.f32 0.0, %v752
          %754 = vmatmul.f32.gmra.mxu0 %v712
          %v755 = vpop.f32.mrf.mxu0
          %v756 = vadd.f32 0.0, %v755
          %757 = vdwg.mxu0
          %v758 = vadd.f32 %v670, %v735
          %v759 = vadd.f32 %v671, %v738
          %v760 = vadd.f32 %v672, %v741
          %v761 = vadd.f32 %v673, %v744
          %v762 = vadd.f32 %v674, %v747
          %v763 = vadd.f32 %v675, %v750
          %v764 = vadd.f32 %v676, %v753
          %v765 = vadd.f32 %v677, %v756
          %766 = vrot.lane.b32.xlu0 %v220, 108
          %v767 = vpop.permute.xlu0 %766
          %v769 = vsel %vm266, %v767, 0.0
          %770 = vrot.lane.b32.xlu0 %v222, 104
          %v771 = vpop.permute.xlu0 %770
          %772 = vrot.lane.b32.xlu0 %v223, 104
          %v773 = vpop.permute.xlu0 %772
          %774 = vrot.lane.b32.xlu0 %v224, 104
          %v775 = vpop.permute.xlu0 %774
          %776 = vrot.lane.b32.xlu0 %v225, 104
          %v777 = vpop.permute.xlu0 %776
          %778 = vrot.lane.b32.xlu0 %v226, 104
          %v779 = vpop.permute.xlu0 %778
          %780 = vrot.lane.b32.xlu0 %v227, 104
          %v781 = vpop.permute.xlu0 %780
          %782 = vrot.lane.b32.xlu0 %v228, 104
          %v783 = vpop.permute.xlu0 %782
          %784 = vrot.lane.b32.xlu0 %v229, 104
          %v785 = vpop.permute.xlu0 %784
          %v786 = vsel %vm296, %v771, 0
          %v788 = vsel %vm296, %v773, 0
          %v790 = vsel %vm296, %v775, 0
          %v792 = vsel %vm296, %v777, 0
          %v794 = vsel %vm296, %v779, 0
          %v796 = vsel %vm296, %v781, 0
          %v798 = vsel %vm296, %v783, 0
          %v800 = vsel %vm296, %v785, 0
          %v803 = vsel %vm313, %v769, 0
          %805 = vmatpush.msra.mxu0 0.0
          %806 = vmatpush.msra.mxu0 0.0
          %807 = vmatpush.msra.mxu0 0.0
          %808 = vmatpush.msra.mxu0 0.0
          %809 = vmatpush.msra.mxu0 0.0
          %810 = vmatpush.msra.mxu0 0.0
          %811 = vmatpush.msra.mxu0 0.0
          %812 = vmatpush.msra.mxu0 0.0
          %813 = vmatpush.msra.mxu0 0.0
          %814 = vmatpush.msra.mxu0 0.0
          %815 = vmatpush.msra.mxu0 0.0
          %816 = vmatpush.msra.mxu0 0.0
          %817 = vmatpush.msra.mxu0 0.0
          %818 = vmatpush.msra.mxu0 0.0
          %819 = vmatpush.msra.mxu0 0.0
          %820 = vmatpush.msra.mxu0 %v803
          %821 = vmatmul.f32.gmra.mxu0 %v786
          %v822 = vpop.f32.mrf.mxu0
          %v823 = vadd.f32 0.0, %v822
          %824 = vmatmul.f32.gmra.mxu0 %v788
          %v825 = vpop.f32.mrf.mxu0
          %v826 = vadd.f32 0.0, %v825
          %827 = vmatmul.f32.gmra.mxu0 %v790
          %v828 = vpop.f32.mrf.mxu0
          %v829 = vadd.f32 0.0, %v828
          %830 = vmatmul.f32.gmra.mxu0 %v792
          %v831 = vpop.f32.mrf.mxu0
          %v832 = vadd.f32 0.0, %v831
          %833 = vmatmul.f32.gmra.mxu0 %v794
          %v834 = vpop.f32.mrf.mxu0
          %v835 = vadd.f32 0.0, %v834
          %836 = vmatmul.f32.gmra.mxu0 %v796
          %v837 = vpop.f32.mrf.mxu0
          %v838 = vadd.f32 0.0, %v837
          %839 = vmatmul.f32.gmra.mxu0 %v798
          %v840 = vpop.f32.mrf.mxu0
          %v841 = vadd.f32 0.0, %v840
          %842 = vmatmul.f32.gmra.mxu0 %v800
          %v843 = vpop.f32.mrf.mxu0
          %v844 = vadd.f32 0.0, %v843
          %845 = vdwg.mxu0
          %v846 = vadd.f32 %v758, %v823
          %v847 = vadd.f32 %v759, %v826
          %v848 = vadd.f32 %v760, %v829
          %v849 = vadd.f32 %v761, %v832
          %v850 = vadd.f32 %v762, %v835
          %v851 = vadd.f32 %v763, %v838
          %v852 = vadd.f32 %v764, %v841
          %v853 = vadd.f32 %v765, %v844
          %854 = vrot.lane.b32.xlu0 %v222, 100
          %v855 = vpop.permute.xlu0 %854
          %856 = vrot.lane.b32.xlu0 %v223, 100
          %v857 = vpop.permute.xlu0 %856
          %858 = vrot.lane.b32.xlu0 %v224, 100
          %v859 = vpop.permute.xlu0 %858
          %860 = vrot.lane.b32.xlu0 %v225, 100
          %v861 = vpop.permute.xlu0 %860
          %862 = vrot.lane.b32.xlu0 %v226, 100
          %v863 = vpop.permute.xlu0 %862
          %864 = vrot.lane.b32.xlu0 %v227, 100
          %v865 = vpop.permute.xlu0 %864
          %866 = vrot.lane.b32.xlu0 %v228, 100
          %v867 = vpop.permute.xlu0 %866
          %868 = vrot.lane.b32.xlu0 %v229, 100
          %v869 = vpop.permute.xlu0 %868
          %870 = vrot.lane.b32.xlu0 %v220, 107
          %v871 = vpop.permute.xlu0 %870
          %v872 = vsel %vm296, %v855, 0
          %v874 = vsel %vm296, %v857, 0
          %v876 = vsel %vm296, %v859, 0
          %v878 = vsel %vm296, %v861, 0
          %v880 = vsel %vm296, %v863, 0
          %v882 = vsel %vm296, %v865, 0
          %v884 = vsel %vm296, %v867, 0
          %v886 = vsel %vm296, %v869, 0
          %v888 = vsel %vm313, %v871, 0
          %890 = vmatpush.msra.mxu0 0.0
          %891 = vmatpush.msra.mxu0 0.0
          %892 = vmatpush.msra.mxu0 0.0
          %893 = vmatpush.msra.mxu0 0.0
          %894 = vmatpush.msra.mxu0 0.0
          %895 = vmatpush.msra.mxu0 0.0
          %896 = vmatpush.msra.mxu0 0.0
          %897 = vmatpush.msra.mxu0 0.0
          %898 = vmatpush.msra.mxu0 0.0
          %899 = vmatpush.msra.mxu0 0.0
          %900 = vmatpush.msra.mxu0 0.0
          %901 = vmatpush.msra.mxu0 0.0
          %902 = vmatpush.msra.mxu0 0.0
          %903 = vmatpush.msra.mxu0 0.0
          %904 = vmatpush.msra.mxu0 0.0
          %905 = vmatpush.msra.mxu0 %v888
          %906 = vmatmul.f32.gmra.mxu0 %v872
          %v907 = vpop.f32.mrf.mxu0
          %v908 = vadd.f32 0.0, %v907
          %909 = vmatmul.f32.gmra.mxu0 %v874
          %v910 = vpop.f32.mrf.mxu0
          %v911 = vadd.f32 0.0, %v910
          %912 = vmatmul.f32.gmra.mxu0 %v876
          %v913 = vpop.f32.mrf.mxu0
          %v914 = vadd.f32 0.0, %v913
          %915 = vmatmul.f32.gmra.mxu0 %v878
          %v916 = vpop.f32.mrf.mxu0
          %v917 = vadd.f32 0.0, %v916
          %918 = vmatmul.f32.gmra.mxu0 %v880
          %v919 = vpop.f32.mrf.mxu0
          %v920 = vadd.f32 0.0, %v919
          %921 = vmatmul.f32.gmra.mxu0 %v882
          %v922 = vpop.f32.mrf.mxu0
          %v923 = vadd.f32 0.0, %v922
          %924 = vmatmul.f32.gmra.mxu0 %v884
          %v925 = vpop.f32.mrf.mxu0
          %v926 = vadd.f32 0.0, %v925
          %927 = vmatmul.f32.gmra.mxu0 %v886
          %v928 = vpop.f32.mrf.mxu0
          %v929 = vadd.f32 0.0, %v928
          %930 = vdwg.mxu0
          %v931 = vadd.f32 %v846, %v908
          %v932 = vadd.f32 %v847, %v911
          %v933 = vadd.f32 %v848, %v914
          %v934 = vadd.f32 %v849, %v917
          %v935 = vadd.f32 %v850, %v920
          %v936 = vadd.f32 %v851, %v923
          %v937 = vadd.f32 %v852, %v926
          %v938 = vadd.f32 %v853, %v929
          %939 = vrot.lane.b32.xlu0 %v220, 106
          %v940 = vpop.permute.xlu0 %939
          %v942 = vsel %vm267, %v940, 0.0
          %943 = vrot.lane.b32.xlu0 %v222, 96
          %v944 = vpop.permute.xlu0 %943
          %945 = vrot.lane.b32.xlu0 %v223, 96
          %v946 = vpop.permute.xlu0 %945
          %947 = vrot.lane.b32.xlu0 %v224, 96
          %v948 = vpop.permute.xlu0 %947
          %949 = vrot.lane.b32.xlu0 %v225, 96
          %v950 = vpop.permute.xlu0 %949
          %951 = vrot.lane.b32.xlu0 %v226, 96
          %v952 = vpop.permute.xlu0 %951
          %953 = vrot.lane.b32.xlu0 %v227, 96
          %v954 = vpop.permute.xlu0 %953
          %955 = vrot.lane.b32.xlu0 %v228, 96
          %v956 = vpop.permute.xlu0 %955
          %957 = vrot.lane.b32.xlu0 %v229, 96
          %v958 = vpop.permute.xlu0 %957
          %v959 = vsel %vm296, %v944, 0
          %v961 = vsel %vm296, %v946, 0
          %v963 = vsel %vm296, %v948, 0
          %v965 = vsel %vm296, %v950, 0
          %v967 = vsel %vm296, %v952, 0
          %v969 = vsel %vm296, %v954, 0
          %v971 = vsel %vm296, %v956, 0
          %v973 = vsel %vm296, %v958, 0
          %v976 = vsel %vm313, %v942, 0
          %978 = vmatpush.msra.mxu0 0.0
          %979 = vmatpush.msra.mxu0 0.0
          %980 = vmatpush.msra.mxu0 0.0
          %981 = vmatpush.msra.mxu0 0.0
          %982 = vmatpush.msra.mxu0 0.0
          %983 = vmatpush.msra.mxu0 0.0
          %984 = vmatpush.msra.mxu0 0.0
          %985 = vmatpush.msra.mxu0 0.0
          %986 = vmatpush.msra.mxu0 0.0
          %987 = vmatpush.msra.mxu0 0.0
          %988 = vmatpush.msra.mxu0 0.0
          %989 = vmatpush.msra.mxu0 0.0
          %990 = vmatpush.msra.mxu0 0.0
          %991 = vmatpush.msra.mxu0 0.0
          %992 = vmatpush.msra.mxu0 0.0
          %993 = vmatpush.msra.mxu0 %v976
          %994 = vmatmul.f32.gmra.mxu0 %v959
          %v995 = vpop.f32.mrf.mxu0
          %v996 = vadd.f32 0.0, %v995
          %997 = vmatmul.f32.gmra.mxu0 %v961
          %v998 = vpop.f32.mrf.mxu0
          %v999 = vadd.f32 0.0, %v998
          %1000 = vmatmul.f32.gmra.mxu0 %v963
          %v1001 = vpop.f32.mrf.mxu0
          %v1002 = vadd.f32 0.0, %v1001
          %1003 = vmatmul.f32.gmra.mxu0 %v965
          %v1004 = vpop.f32.mrf.mxu0
          %v1005 = vadd.f32 0.0, %v1004
          %1006 = vmatmul.f32.gmra.mxu0 %v967
          %v1007 = vpop.f32.mrf.mxu0
          %v1008 = vadd.f32 0.0, %v1007
          %1009 = vmatmul.f32.gmra.mxu0 %v969
          %v1010 = vpop.f32.mrf.mxu0
          %v1011 = vadd.f32 0.0, %v1010
          %1012 = vmatmul.f32.gmra.mxu0 %v971
          %v1013 = vpop.f32.mrf.mxu0
          %v1014 = vadd.f32 0.0, %v1013
          %1015 = vmatmul.f32.gmra.mxu0 %v973
          %v1016 = vpop.f32.mrf.mxu0
          %v1017 = vadd.f32 0.0, %v1016
          %1018 = vdwg.mxu0
          %v1019 = vadd.f32 %v931, %v996
          %v1020 = vadd.f32 %v932, %v999
          %v1021 = vadd.f32 %v933, %v1002
          %v1022 = vadd.f32 %v934, %v1005
          %v1023 = vadd.f32 %v935, %v1008
          %v1024 = vadd.f32 %v936, %v1011
          %v1025 = vadd.f32 %v937, %v1014
          %v1026 = vadd.f32 %v938, %v1017
          %v1027 = vld [vmem:[%s2] sm:$0xff]
          %v1028 = vld [vmem:[%s2 + $0x8] sm:$0xff]
          %v1029 = vld [vmem:[%s2 + $0x10] sm:$0xff]
          %v1030 = vld [vmem:[%s2 + $0x18] sm:$0xff]
          %v1031 = vld [vmem:[%s2 + $0x20] sm:$0xff]
          %v1032 = vld [vmem:[%s2 + $0x28] sm:$0xff]
          %v1033 = vld [vmem:[%s2 + $0x30] sm:$0xff]
          %v1034 = vld [vmem:[%s2 + $0x38] sm:$0xff]
          %1036 = vset.pattern.permute.xlu0 0
          %1037 = vperm.xlu0 %1036, %v1027
          %v1038 = vpop.permute.xlu0 %1037
          %1041 = vset.pattern.permute.xlu0 0
          %1042 = vperm.xlu0 %1041, %v1028
          %v1043 = vpop.permute.xlu0 %1042
          %1046 = vset.pattern.permute.xlu0 0
          %1047 = vperm.xlu0 %1046, %v1029
          %v1048 = vpop.permute.xlu0 %1047
          %1051 = vset.pattern.permute.xlu0 0
          %1052 = vperm.xlu0 %1051, %v1030
          %v1053 = vpop.permute.xlu0 %1052
          %1056 = vset.pattern.permute.xlu0 0
          %1057 = vperm.xlu0 %1056, %v1031
          %v1058 = vpop.permute.xlu0 %1057
          %1061 = vset.pattern.permute.xlu0 0
          %1062 = vperm.xlu0 %1061, %v1032
          %v1063 = vpop.permute.xlu0 %1062
          %1066 = vset.pattern.permute.xlu0 0
          %1067 = vperm.xlu0 %1066, %v1033
          %v1068 = vpop.permute.xlu0 %1067
          %1071 = vset.pattern.permute.xlu0 0
          %1072 = vperm.xlu0 %1071, %v1034
          %v1073 = vpop.permute.xlu0 %1072
          %v1075 = vadd.f32 %v1019, %v1038
          %v1076 = vadd.f32 %v1020, %v1043
          %v1077 = vadd.f32 %v1021, %v1048
          %v1078 = vadd.f32 %v1022, %v1053
          %v1079 = vadd.f32 %v1023, %v1058
          %v1080 = vadd.f32 %v1024, %v1063
          %v1081 = vadd.f32 %v1025, %v1068
          %v1082 = vadd.f32 %v1026, %v1073
          %v1083 = vmax.f32 %v1075, 0.0
          %v1084 = vmax.f32 %v1076, 0.0
          %v1085 = vmax.f32 %v1077, 0.0
          %v1086 = vmax.f32 %v1078, 0.0
          %v1087 = vmax.f32 %v1079, 0.0
          %v1088 = vmax.f32 %v1080, 0.0
          %v1089 = vmax.f32 %v1081, 0.0
          %v1090 = vmax.f32 %v1082, 0.0
          %vm1091 = vcmask 818176
          %1092 = vst.msk [vmem:[#allocation2] sm:$0xff] %vm1091, %v1083
          %1093 = vst.msk [vmem:[#allocation2 + $0x8] sm:$0xff] %vm1091, %v1084
          %s1094 = scalar_lea.vmem [#allocation2], 32
          %1095 = vst.msk [vmem:[%s1094] sm:$0xff] %vm1091, %v1085
          %1096 = vst.msk [vmem:[%s1094 + $0x8] sm:$0xff] %vm1091, %v1086
          %s1097 = scalar_lea.vmem [#allocation2], 64
          %1098 = vst.msk [vmem:[%s1097] sm:$0xff] %vm1091, %v1087
          %1099 = vst.msk [vmem:[%s1097 + $0x8] sm:$0xff] %vm1091, %v1088
          %s1100 = scalar_lea.vmem [#allocation2], 96
          %1101 = vst.msk [vmem:[%s1100] sm:$0xff] %vm1091, %v1089
          %1102 = vst.msk [vmem:[%s1100 + $0x8] sm:$0xff] %vm1091, %v1090
          %v1103 = vsel %vm266, %v221, 0.0
          %1105 = vrot.lane.b32.xlu0 %v221, 127
          %v1106 = vpop.permute.xlu0 %1105
          %v1107 = vsel %vm313, %v1106, 0
          %1109 = vmatpush.msra.mxu0 0.0
          %1110 = vmatpush.msra.mxu0 0.0
          %1111 = vmatpush.msra.mxu0 0.0
          %1112 = vmatpush.msra.mxu0 0.0
          %1113 = vmatpush.msra.mxu0 0.0
          %1114 = vmatpush.msra.mxu0 0.0
          %1115 = vmatpush.msra.mxu0 0.0
          %1116 = vmatpush.msra.mxu0 0.0
          %1117 = vmatpush.msra.mxu0 0.0
          %1118 = vmatpush.msra.mxu0 0.0
          %1119 = vmatpush.msra.mxu0 0.0
          %1120 = vmatpush.msra.mxu0 0.0
          %1121 = vmatpush.msra.mxu0 0.0
          %1122 = vmatpush.msra.mxu0 0.0
          %1123 = vmatpush.msra.mxu0 0.0
          %1124 = vmatpush.msra.mxu0 %v1107
          %1125 = vmatmul.f32.gmra.mxu0 %v297
          %v1126 = vpop.f32.mrf.mxu0
          %v1127 = vadd.f32 0.0, %v1126
          %1128 = vmatmul.f32.gmra.mxu0 %v299
          %v1129 = vpop.f32.mrf.mxu0
          %v1130 = vadd.f32 0.0, %v1129
          %1131 = vmatmul.f32.gmra.mxu0 %v301
          %v1132 = vpop.f32.mrf.mxu0
          %v1133 = vadd.f32 0.0, %v1132
          %1134 = vmatmul.f32.gmra.mxu0 %v303
          %v1135 = vpop.f32.mrf.mxu0
          %v1136 = vadd.f32 0.0, %v1135
          %1137 = vmatmul.f32.gmra.mxu0 %v305
          %v1138 = vpop.f32.mrf.mxu0
          %v1139 = vadd.f32 0.0, %v1138
          %1140 = vmatmul.f32.gmra.mxu0 %v307
          %v1141 = vpop.f32.mrf.mxu0
          %v1142 = vadd.f32 0.0, %v1141
          %1143 = vmatmul.f32.gmra.mxu0 %v309
          %v1144 = vpop.f32.mrf.mxu0
          %v1145 = vadd.f32 0.0, %v1144
          %1146 = vmatmul.f32.gmra.mxu0 %v311
          %v1147 = vpop.f32.mrf.mxu0
          %v1148 = vadd.f32 0.0, %v1147
          %1149 = vdwg.mxu0
          %v1151 = vsel %vm313, %v1103, 0
          %1153 = vmatpush.msra.mxu0 0.0
          %1154 = vmatpush.msra.mxu0 0.0
          %1155 = vmatpush.msra.mxu0 0.0
          %1156 = vmatpush.msra.mxu0 0.0
          %1157 = vmatpush.msra.mxu0 0.0
          %1158 = vmatpush.msra.mxu0 0.0
          %1159 = vmatpush.msra.mxu0 0.0
          %1160 = vmatpush.msra.mxu0 0.0
          %1161 = vmatpush.msra.mxu0 0.0
          %1162 = vmatpush.msra.mxu0 0.0
          %1163 = vmatpush.msra.mxu0 0.0
          %1164 = vmatpush.msra.mxu0 0.0
          %1165 = vmatpush.msra.mxu0 0.0
          %1166 = vmatpush.msra.mxu0 0.0
          %1167 = vmatpush.msra.mxu0 0.0
          %1168 = vmatpush.msra.mxu0 %v1151
          %1169 = vmatmul.f32.gmra.mxu0 %v357
          %v1170 = vpop.f32.mrf.mxu0
          %v1171 = vadd.f32 %v1127, %v1170
          %1172 = vmatmul.f32.gmra.mxu0 %v359
          %v1173 = vpop.f32.mrf.mxu0
          %v1174 = vadd.f32 %v1130, %v1173
          %1175 = vmatmul.f32.gmra.mxu0 %v361
          %v1176 = vpop.f32.mrf.mxu0
          %v1177 = vadd.f32 %v1133, %v1176
          %1178 = vmatmul.f32.gmra.mxu0 %v363
          %v1179 = vpop.f32.mrf.mxu0
          %v1180 = vadd.f32 %v1136, %v1179
          %1181 = vmatmul.f32.gmra.mxu0 %v365
          %v1182 = vpop.f32.mrf.mxu0
          %v1183 = vadd.f32 %v1139, %v1182
          %1184 = vmatmul.f32.gmra.mxu0 %v367
          %v1185 = vpop.f32.mrf.mxu0
          %v1186 = vadd.f32 %v1142, %v1185
          %1187 = vmatmul.f32.gmra.mxu0 %v369
          %v1188 = vpop.f32.mrf.mxu0
          %v1189 = vadd.f32 %v1145, %v1188
          %1190 = vmatmul.f32.gmra.mxu0 %v371
          %v1191 = vpop.f32.mrf.mxu0
          %v1192 = vadd.f32 %v1148, %v1191
          %1193 = vdwg.mxu0
          %1194 = vrot.lane.b32.xlu0 %v221, 126
          %v1195 = vpop.permute.xlu0 %1194
          %v1197 = vsel %vm267, %v1195, 0.0
          %v1199 = vsel %vm313, %v1197, 0
          %1201 = vmatpush.msra.mxu0 0.0
          %1202 = vmatpush.msra.mxu0 0.0
          %1203 = vmatpush.msra.mxu0 0.0
          %1204 = vmatpush.msra.mxu0 0.0
          %1205 = vmatpush.msra.mxu0 0.0
          %1206 = vmatpush.msra.mxu0 0.0
          %1207 = vmatpush.msra.mxu0 0.0
          %1208 = vmatpush.msra.mxu0 0.0
          %1209 = vmatpush.msra.mxu0 0.0
          %1210 = vmatpush.msra.mxu0 0.0
          %1211 = vmatpush.msra.mxu0 0.0
          %1212 = vmatpush.msra.mxu0 0.0
          %1213 = vmatpush.msra.mxu0 0.0
          %1214 = vmatpush.msra.mxu0 0.0
          %1215 = vmatpush.msra.mxu0 0.0
          %1216 = vmatpush.msra.mxu0 %v1199
          %1217 = vmatmul.f32.gmra.mxu0 %v437
          %v1218 = vpop.f32.mrf.mxu0
          %v1219 = vadd.f32 0.0, %v1218
          %1220 = vmatmul.f32.gmra.mxu0 %v439
          %v1221 = vpop.f32.mrf.mxu0
          %v1222 = vadd.f32 0.0, %v1221
          %1223 = vmatmul.f32.gmra.mxu0 %v441
          %v1224 = vpop.f32.mrf.mxu0
          %v1225 = vadd.f32 0.0, %v1224
          %1226 = vmatmul.f32.gmra.mxu0 %v443
          %v1227 = vpop.f32.mrf.mxu0
          %v1228 = vadd.f32 0.0, %v1227
          %1229 = vmatmul.f32.gmra.mxu0 %v445
          %v1230 = vpop.f32.mrf.mxu0
          %v1231 = vadd.f32 0.0, %v1230
          %1232 = vmatmul.f32.gmra.mxu0 %v447
          %v1233 = vpop.f32.mrf.mxu0
          %v1234 = vadd.f32 0.0, %v1233
          %1235 = vmatmul.f32.gmra.mxu0 %v449
          %v1236 = vpop.f32.mrf.mxu0
          %v1237 = vadd.f32 0.0, %v1236
          %1238 = vmatmul.f32.gmra.mxu0 %v451
          %v1239 = vpop.f32.mrf.mxu0
          %v1240 = vadd.f32 0.0, %v1239
          %1241 = vdwg.mxu0
          %v1242 = vadd.f32 %v1171, %v1219
          %v1243 = vadd.f32 %v1174, %v1222
          %v1244 = vadd.f32 %v1177, %v1225
          %v1245 = vadd.f32 %v1180, %v1228
          %v1246 = vadd.f32 %v1183, %v1231
          %v1247 = vadd.f32 %v1186, %v1234
          %v1248 = vadd.f32 %v1189, %v1237
          %v1249 = vadd.f32 %v1192, %v1240
          %1250 = vrot.lane.b32.xlu0 %v221, 118
          %v1251 = vpop.permute.xlu0 %1250
          %v1253 = vsel %vm266, %v1251, 0.0
          %v1255 = vsel %vm313, %v1253, 0
          %1257 = vmatpush.msra.mxu0 0.0
          %1258 = vmatpush.msra.mxu0 0.0
          %1259 = vmatpush.msra.mxu0 0.0
          %1260 = vmatpush.msra.mxu0 0.0
          %1261 = vmatpush.msra.mxu0 0.0
          %1262 = vmatpush.msra.mxu0 0.0
          %1263 = vmatpush.msra.mxu0 0.0
          %1264 = vmatpush.msra.mxu0 0.0
          %1265 = vmatpush.msra.mxu0 0.0
          %1266 = vmatpush.msra.mxu0 0.0
          %1267 = vmatpush.msra.mxu0 0.0
          %1268 = vmatpush.msra.mxu0 0.0
          %1269 = vmatpush.msra.mxu0 0.0
          %1270 = vmatpush.msra.mxu0 0.0
          %1271 = vmatpush.msra.mxu0 0.0
          %1272 = vmatpush.msra.mxu0 %v1255
          %1273 = vmatmul.f32.gmra.mxu0 %v525
          %v1274 = vpop.f32.mrf.mxu0
          %v1275 = vadd.f32 0.0, %v1274
          %1276 = vmatmul.f32.gmra.mxu0 %v527
          %v1277 = vpop.f32.mrf.mxu0
          %v1278 = vadd.f32 0.0, %v1277
          %1279 = vmatmul.f32.gmra.mxu0 %v529
          %v1280 = vpop.f32.mrf.mxu0
          %v1281 = vadd.f32 0.0, %v1280
          %1282 = vmatmul.f32.gmra.mxu0 %v531
          %v1283 = vpop.f32.mrf.mxu0
          %v1284 = vadd.f32 0.0, %v1283
          %1285 = vmatmul.f32.gmra.mxu0 %v533
          %v1286 = vpop.f32.mrf.mxu0
          %v1287 = vadd.f32 0.0, %v1286
          %1288 = vmatmul.f32.gmra.mxu0 %v535
          %v1289 = vpop.f32.mrf.mxu0
          %v1290 = vadd.f32 0.0, %v1289
          %1291 = vmatmul.f32.gmra.mxu0 %v537
          %v1292 = vpop.f32.mrf.mxu0
          %v1293 = vadd.f32 0.0, %v1292
          %1294 = vmatmul.f32.gmra.mxu0 %v539
          %v1295 = vpop.f32.mrf.mxu0
          %v1296 = vadd.f32 0.0, %v1295
          %1297 = vdwg.mxu0
          %v1298 = vadd.f32 %v1242, %v1275
          %v1299 = vadd.f32 %v1243, %v1278
          %v1300 = vadd.f32 %v1244, %v1281
          %v1301 = vadd.f32 %v1245, %v1284
          %v1302 = vadd.f32 %v1246, %v1287
          %v1303 = vadd.f32 %v1247, %v1290
          %v1304 = vadd.f32 %v1248, %v1293
          %v1305 = vadd.f32 %v1249, %v1296
          %1306 = vrot.lane.b32.xlu0 %v221, 117
          %v1307 = vpop.permute.xlu0 %1306
          %v1308 = vsel %vm313, %v1307, 0
          %1310 = vmatpush.msra.mxu0 0.0
          %1311 = vmatpush.msra.mxu0 0.0
          %1312 = vmatpush.msra.mxu0 0.0
          %1313 = vmatpush.msra.mxu0 0.0
          %1314 = vmatpush.msra.mxu0 0.0
          %1315 = vmatpush.msra.mxu0 0.0
          %1316 = vmatpush.msra.mxu0 0.0
          %1317 = vmatpush.msra.mxu0 0.0
          %1318 = vmatpush.msra.mxu0 0.0
          %1319 = vmatpush.msra.mxu0 0.0
          %1320 = vmatpush.msra.mxu0 0.0
          %1321 = vmatpush.msra.mxu0 0.0
          %1322 = vmatpush.msra.mxu0 0.0
          %1323 = vmatpush.msra.mxu0 0.0
          %1324 = vmatpush.msra.mxu0 0.0
          %1325 = vmatpush.msra.mxu0 %v1308
          %1326 = vmatmul.f32.gmra.mxu0 %v611
          %v1327 = vpop.f32.mrf.mxu0
          %v1328 = vadd.f32 0.0, %v1327
          %1329 = vmatmul.f32.gmra.mxu0 %v613
          %v1330 = vpop.f32.mrf.mxu0
          %v1331 = vadd.f32 0.0, %v1330
          %1332 = vmatmul.f32.gmra.mxu0 %v615
          %v1333 = vpop.f32.mrf.mxu0
          %v1334 = vadd.f32 0.0, %v1333
          %1335 = vmatmul.f32.gmra.mxu0 %v617
          %v1336 = vpop.f32.mrf.mxu0
          %v1337 = vadd.f32 0.0, %v1336
          %1338 = vmatmul.f32.gmra.mxu0 %v619
          %v1339 = vpop.f32.mrf.mxu0
          %v1340 = vadd.f32 0.0, %v1339
          %1341 = vmatmul.f32.gmra.mxu0 %v621
          %v1342 = vpop.f32.mrf.mxu0
          %v1343 = vadd.f32 0.0, %v1342
          %1344 = vmatmul.f32.gmra.mxu0 %v623
          %v1345 = vpop.f32.mrf.mxu0
          %v1346 = vadd.f32 0.0, %v1345
          %1347 = vmatmul.f32.gmra.mxu0 %v625
          %v1348 = vpop.f32.mrf.mxu0
          %v1349 = vadd.f32 0.0, %v1348
          %1350 = vdwg.mxu0
          %v1351 = vadd.f32 %v1298, %v1328
          %v1352 = vadd.f32 %v1299, %v1331
          %v1353 = vadd.f32 %v1300, %v1334
          %v1354 = vadd.f32 %v1301, %v1337
          %v1355 = vadd.f32 %v1302, %v1340
          %v1356 = vadd.f32 %v1303, %v1343
          %v1357 = vadd.f32 %v1304, %v1346
          %v1358 = vadd.f32 %v1305, %v1349
          %1359 = vrot.lane.b32.xlu0 %v221, 116
          %v1360 = vpop.permute.xlu0 %1359
          %v1362 = vsel %vm267, %v1360, 0.0
          %v1364 = vsel %vm313, %v1362, 0
          %1366 = vmatpush.msra.mxu0 0.0
          %1367 = vmatpush.msra.mxu0 0.0
          %1368 = vmatpush.msra.mxu0 0.0
          %1369 = vmatpush.msra.mxu0 0.0
          %1370 = vmatpush.msra.mxu0 0.0
          %1371 = vmatpush.msra.mxu0 0.0
          %1372 = vmatpush.msra.mxu0 0.0
          %1373 = vmatpush.msra.mxu0 0.0
          %1374 = vmatpush.msra.mxu0 0.0
          %1375 = vmatpush.msra.mxu0 0.0
          %1376 = vmatpush.msra.mxu0 0.0
          %1377 = vmatpush.msra.mxu0 0.0
          %1378 = vmatpush.msra.mxu0 0.0
          %1379 = vmatpush.msra.mxu0 0.0
          %1380 = vmatpush.msra.mxu0 0.0
          %1381 = vmatpush.msra.mxu0 %v1364
          %1382 = vmatmul.f32.gmra.mxu0 %v698
          %v1383 = vpop.f32.mrf.mxu0
          %v1384 = vadd.f32 0.0, %v1383
          %1385 = vmatmul.f32.gmra.mxu0 %v700
          %v1386 = vpop.f32.mrf.mxu0
          %v1387 = vadd.f32 0.0, %v1386
          %1388 = vmatmul.f32.gmra.mxu0 %v702
          %v1389 = vpop.f32.mrf.mxu0
          %v1390 = vadd.f32 0.0, %v1389
          %1391 = vmatmul.f32.gmra.mxu0 %v704
          %v1392 = vpop.f32.mrf.mxu0
          %v1393 = vadd.f32 0.0, %v1392
          %1394 = vmatmul.f32.gmra.mxu0 %v706
          %v1395 = vpop.f32.mrf.mxu0
          %v1396 = vadd.f32 0.0, %v1395
          %1397 = vmatmul.f32.gmra.mxu0 %v708
          %v1398 = vpop.f32.mrf.mxu0
          %v1399 = vadd.f32 0.0, %v1398
          %1400 = vmatmul.f32.gmra.mxu0 %v710
          %v1401 = vpop.f32.mrf.mxu0
          %v1402 = vadd.f32 0.0, %v1401
          %1403 = vmatmul.f32.gmra.mxu0 %v712
          %v1404 = vpop.f32.mrf.mxu0
          %v1405 = vadd.f32 0.0, %v1404
          %1406 = vdwg.mxu0
          %v1407 = vadd.f32 %v1351, %v1384
          %v1408 = vadd.f32 %v1352, %v1387
          %v1409 = vadd.f32 %v1353, %v1390
          %v1410 = vadd.f32 %v1354, %v1393
          %v1411 = vadd.f32 %v1355, %v1396
          %v1412 = vadd.f32 %v1356, %v1399
          %v1413 = vadd.f32 %v1357, %v1402
          %v1414 = vadd.f32 %v1358, %v1405
          %1415 = vrot.lane.b32.xlu0 %v221, 108
          %v1416 = vpop.permute.xlu0 %1415
          %v1418 = vsel %vm266, %v1416, 0.0
          %v1420 = vsel %vm313, %v1418, 0
          %1422 = vmatpush.msra.mxu0 0.0
          %1423 = vmatpush.msra.mxu0 0.0
          %1424 = vmatpush.msra.mxu0 0.0
          %1425 = vmatpush.msra.mxu0 0.0
          %1426 = vmatpush.msra.mxu0 0.0
          %1427 = vmatpush.msra.mxu0 0.0
          %1428 = vmatpush.msra.mxu0 0.0
          %1429 = vmatpush.msra.mxu0 0.0
          %1430 = vmatpush.msra.mxu0 0.0
          %1431 = vmatpush.msra.mxu0 0.0
          %1432 = vmatpush.msra.mxu0 0.0
          %1433 = vmatpush.msra.mxu0 0.0
          %1434 = vmatpush.msra.mxu0 0.0
          %1435 = vmatpush.msra.mxu0 0.0
          %1436 = vmatpush.msra.mxu0 0.0
          %1437 = vmatpush.msra.mxu0 %v1420
          %1438 = vmatmul.f32.gmra.mxu0 %v786
          %v1439 = vpop.f32.mrf.mxu0
          %v1440 = vadd.f32 0.0, %v1439
          %1441 = vmatmul.f32.gmra.mxu0 %v788
          %v1442 = vpop.f32.mrf.mxu0
          %v1443 = vadd.f32 0.0, %v1442
          %1444 = vmatmul.f32.gmra.mxu0 %v790
          %v1445 = vpop.f32.mrf.mxu0
          %v1446 = vadd.f32 0.0, %v1445
          %1447 = vmatmul.f32.gmra.mxu0 %v792
          %v1448 = vpop.f32.mrf.mxu0
          %v1449 = vadd.f32 0.0, %v1448
          %1450 = vmatmul.f32.gmra.mxu0 %v794
          %v1451 = vpop.f32.mrf.mxu0
          %v1452 = vadd.f32 0.0, %v1451
          %1453 = vmatmul.f32.gmra.mxu0 %v796
          %v1454 = vpop.f32.mrf.mxu0
          %v1455 = vadd.f32 0.0, %v1454
          %1456 = vmatmul.f32.gmra.mxu0 %v798
          %v1457 = vpop.f32.mrf.mxu0
          %v1458 = vadd.f32 0.0, %v1457
          %1459 = vmatmul.f32.gmra.mxu0 %v800
          %v1460 = vpop.f32.mrf.mxu0
          %v1461 = vadd.f32 0.0, %v1460
          %1462 = vdwg.mxu0
          %v1463 = vadd.f32 %v1407, %v1440
          %v1464 = vadd.f32 %v1408, %v1443
          %v1465 = vadd.f32 %v1409, %v1446
          %v1466 = vadd.f32 %v1410, %v1449
          %v1467 = vadd.f32 %v1411, %v1452
          %v1468 = vadd.f32 %v1412, %v1455
          %v1469 = vadd.f32 %v1413, %v1458
          %v1470 = vadd.f32 %v1414, %v1461
          %1471 = vrot.lane.b32.xlu0 %v221, 107
          %v1472 = vpop.permute.xlu0 %1471
          %v1473 = vsel %vm313, %v1472, 0
          %1475 = vmatpush.msra.mxu0 0.0
          %1476 = vmatpush.msra.mxu0 0.0
          %1477 = vmatpush.msra.mxu0 0.0
          %1478 = vmatpush.msra.mxu0 0.0
          %1479 = vmatpush.msra.mxu0 0.0
          %1480 = vmatpush.msra.mxu0 0.0
          %1481 = vmatpush.msra.mxu0 0.0
          %1482 = vmatpush.msra.mxu0 0.0
          %1483 = vmatpush.msra.mxu0 0.0
          %1484 = vmatpush.msra.mxu0 0.0
          %1485 = vmatpush.msra.mxu0 0.0
          %1486 = vmatpush.msra.mxu0 0.0
          %1487 = vmatpush.msra.mxu0 0.0
          %1488 = vmatpush.msra.mxu0 0.0
          %1489 = vmatpush.msra.mxu0 0.0
          %1490 = vmatpush.msra.mxu0 %v1473
          %1491 = vmatmul.f32.gmra.mxu0 %v872
          %v1492 = vpop.f32.mrf.mxu0
          %v1493 = vadd.f32 0.0, %v1492
          %1494 = vmatmul.f32.gmra.mxu0 %v874
          %v1495 = vpop.f32.mrf.mxu0
          %v1496 = vadd.f32 0.0, %v1495
          %1497 = vmatmul.f32.gmra.mxu0 %v876
          %v1498 = vpop.f32.mrf.mxu0
          %v1499 = vadd.f32 0.0, %v1498
          %1500 = vmatmul.f32.gmra.mxu0 %v878
          %v1501 = vpop.f32.mrf.mxu0
          %v1502 = vadd.f32 0.0, %v1501
          %1503 = vmatmul.f32.gmra.mxu0 %v880
          %v1504 = vpop.f32.mrf.mxu0
          %v1505 = vadd.f32 0.0, %v1504
          %1506 = vmatmul.f32.gmra.mxu0 %v882
          %v1507 = vpop.f32.mrf.mxu0
          %v1508 = vadd.f32 0.0, %v1507
          %1509 = vmatmul.f32.gmra.mxu0 %v884
          %v1510 = vpop.f32.mrf.mxu0
          %v1511 = vadd.f32 0.0, %v1510
          %1512 = vmatmul.f32.gmra.mxu0 %v886
          %v1513 = vpop.f32.mrf.mxu0
          %v1514 = vadd.f32 0.0, %v1513
          %1515 = vdwg.mxu0
          %v1516 = vadd.f32 %v1463, %v1493
          %v1517 = vadd.f32 %v1464, %v1496
          %v1518 = vadd.f32 %v1465, %v1499
          %v1519 = vadd.f32 %v1466, %v1502
          %v1520 = vadd.f32 %v1467, %v1505
          %v1521 = vadd.f32 %v1468, %v1508
          %v1522 = vadd.f32 %v1469, %v1511
          %v1523 = vadd.f32 %v1470, %v1514
          %1524 = vrot.lane.b32.xlu0 %v221, 106
          %v1525 = vpop.permute.xlu0 %1524
          %v1527 = vsel %vm267, %v1525, 0.0
          %v1529 = vsel %vm313, %v1527, 0
          %1531 = vmatpush.msra.mxu0 0.0
          %1532 = vmatpush.msra.mxu0 0.0
          %1533 = vmatpush.msra.mxu0 0.0
          %1534 = vmatpush.msra.mxu0 0.0
          %1535 = vmatpush.msra.mxu0 0.0
          %1536 = vmatpush.msra.mxu0 0.0
          %1537 = vmatpush.msra.mxu0 0.0
          %1538 = vmatpush.msra.mxu0 0.0
          %1539 = vmatpush.msra.mxu0 0.0
          %1540 = vmatpush.msra.mxu0 0.0
          %1541 = vmatpush.msra.mxu0 0.0
          %1542 = vmatpush.msra.mxu0 0.0
          %1543 = vmatpush.msra.mxu0 0.0
          %1544 = vmatpush.msra.mxu0 0.0
          %1545 = vmatpush.msra.mxu0 0.0
          %1546 = vmatpush.msra.mxu0 %v1529
          %1547 = vmatmul.f32.gmra.mxu0 %v959
          %v1548 = vpop.f32.mrf.mxu0
          %v1549 = vadd.f32 0.0, %v1548
          %1550 = vmatmul.f32.gmra.mxu0 %v961
          %v1551 = vpop.f32.mrf.mxu0
          %v1552 = vadd.f32 0.0, %v1551
          %1553 = vmatmul.f32.gmra.mxu0 %v963
          %v1554 = vpop.f32.mrf.mxu0
          %v1555 = vadd.f32 0.0, %v1554
          %1556 = vmatmul.f32.gmra.mxu0 %v965
          %v1557 = vpop.f32.mrf.mxu0
          %v1558 = vadd.f32 0.0, %v1557
          %1559 = vmatmul.f32.gmra.mxu0 %v967
          %v1560 = vpop.f32.mrf.mxu0
          %v1561 = vadd.f32 0.0, %v1560
          %1562 = vmatmul.f32.gmra.mxu0 %v969
          %v1563 = vpop.f32.mrf.mxu0
          %v1564 = vadd.f32 0.0, %v1563
          %1565 = vmatmul.f32.gmra.mxu0 %v971
          %v1566 = vpop.f32.mrf.mxu0
          %v1567 = vadd.f32 0.0, %v1566
          %1568 = vmatmul.f32.gmra.mxu0 %v973
          %v1569 = vpop.f32.mrf.mxu0
          %v1570 = vadd.f32 0.0, %v1569
          %1571 = vdwg.mxu0
          %v1572 = vadd.f32 %v1516, %v1549
          %v1573 = vadd.f32 %v1517, %v1552
          %v1574 = vadd.f32 %v1518, %v1555
          %v1575 = vadd.f32 %v1519, %v1558
          %v1576 = vadd.f32 %v1520, %v1561
          %v1577 = vadd.f32 %v1521, %v1564
          %v1578 = vadd.f32 %v1522, %v1567
          %v1579 = vadd.f32 %v1523, %v1570
          %v1580 = vld [vmem:[%s2] sm:$0xff]
          %v1581 = vld [vmem:[%s2 + $0x8] sm:$0xff]
          %v1582 = vld [vmem:[%s2 + $0x10] sm:$0xff]
          %v1583 = vld [vmem:[%s2 + $0x18] sm:$0xff]
          %v1584 = vld [vmem:[%s2 + $0x20] sm:$0xff]
          %v1585 = vld [vmem:[%s2 + $0x28] sm:$0xff]
          %v1586 = vld [vmem:[%s2 + $0x30] sm:$0xff]
          %v1587 = vld [vmem:[%s2 + $0x38] sm:$0xff]
          %1589 = vset.pattern.permute.xlu0 0
          %1590 = vperm.xlu0 %1589, %v1580
          %v1591 = vpop.permute.xlu0 %1590
          %1594 = vset.pattern.permute.xlu0 0
          %1595 = vperm.xlu0 %1594, %v1581
          %v1596 = vpop.permute.xlu0 %1595
          %1599 = vset.pattern.permute.xlu0 0
          %1600 = vperm.xlu0 %1599, %v1582
          %v1601 = vpop.permute.xlu0 %1600
          %1604 = vset.pattern.permute.xlu0 0
          %1605 = vperm.xlu0 %1604, %v1583
          %v1606 = vpop.permute.xlu0 %1605
          %1609 = vset.pattern.permute.xlu0 0
          %1610 = vperm.xlu0 %1609, %v1584
          %v1611 = vpop.permute.xlu0 %1610
          %1614 = vset.pattern.permute.xlu0 0
          %1615 = vperm.xlu0 %1614, %v1585
          %v1616 = vpop.permute.xlu0 %1615
          %1619 = vset.pattern.permute.xlu0 0
          %1620 = vperm.xlu0 %1619, %v1586
          %v1621 = vpop.permute.xlu0 %1620
          %1624 = vset.pattern.permute.xlu0 0
          %1625 = vperm.xlu0 %1624, %v1587
          %v1626 = vpop.permute.xlu0 %1625
          %v1628 = vadd.f32 %v1572, %v1591
          %v1629 = vadd.f32 %v1573, %v1596
          %v1630 = vadd.f32 %v1574, %v1601
          %v1631 = vadd.f32 %v1575, %v1606
          %v1632 = vadd.f32 %v1576, %v1611
          %v1633 = vadd.f32 %v1577, %v1616
          %v1634 = vadd.f32 %v1578, %v1621
          %v1635 = vadd.f32 %v1579, %v1626
          %v1636 = vmax.f32 %v1628, 0.0
          %v1637 = vmax.f32 %v1629, 0.0
          %v1638 = vmax.f32 %v1630, 0.0
          %v1639 = vmax.f32 %v1631, 0.0
          %v1640 = vmax.f32 %v1632, 0.0
          %v1641 = vmax.f32 %v1633, 0.0
          %v1642 = vmax.f32 %v1634, 0.0
          %v1643 = vmax.f32 %v1635, 0.0
          %s1644 = scalar_lea.vmem [#allocation2], 16
          %1645 = vst.msk [vmem:[%s1644] sm:$0xff] %vm1091, %v1636
          %1646 = vst.msk [vmem:[%s1644 + $0x8] sm:$0xff] %vm1091, %v1637
          %s1647 = scalar_lea.vmem [#allocation2], 48
          %1648 = vst.msk [vmem:[%s1647] sm:$0xff] %vm1091, %v1638
          %1649 = vst.msk [vmem:[%s1647 + $0x8] sm:$0xff] %vm1091, %v1639
          %s1650 = scalar_lea.vmem [#allocation2], 80
          %1651 = vst.msk [vmem:[%s1650] sm:$0xff] %vm1091, %v1640
          %1652 = vst.msk [vmem:[%s1650 + $0x8] sm:$0xff] %vm1091, %v1641
          %s1653 = scalar_lea.vmem [#allocation2], 112
          %1654 = vst.msk [vmem:[%s1653] sm:$0xff] %vm1091, %v1642
          %1655 = vst.msk [vmem:[%s1653 + $0x8] sm:$0xff] %vm1091, %v1643
          %v1656 = vld [vmem:[%s4] sm:$0x1]
          %v1658 = vperm.slane %v1656, 0
          %1660 = vst [vmem:[#allocation3] sm:$0x3] %v1658
        $region44: #{epsilon_c_forward.1} parent=39 // pred_fallthru
          _
        %s1661 = smul.u32 %s17, 32
        %s1662 = scalar_lea.vmem [#allocation2], %s1661
        %v1663 = vld [vmem:[%s1662] sm:$0xff]
        %v1664 = vld [vmem:[%s1662 + $0x8] sm:$0xff]
        %v1665 = vld [vmem:[%s1662 + $0x10] sm:$0xff]
        %v1666 = vld [vmem:[%s1662 + $0x18] sm:$0xff]
        %v1667 = vld [vmem:[#allocation3] sm:$0x3]
        %v1668 = vld [vmem:[%s214] sm:$0xff]
        %v1669 = vld [vmem:[%s214 + $0x8] sm:$0xff]
        %v1670 = vld [vmem:[%s214 + $0x10] sm:$0xff]
        %v1671 = vld [vmem:[%s214 + $0x18] sm:$0xff]
        %v1672 = vld [vmem:[%s214 + $0x20] sm:$0xff]
        %v1673 = vld [vmem:[%s214 + $0x28] sm:$0xff]
        %v1674 = vld [vmem:[%s214 + $0x30] sm:$0xff]
        %v1675 = vld [vmem:[%s214 + $0x38] sm:$0xff]
        %v1676 = vld [vmem:[%s214 + $0x40] sm:$0xff]
        %v1677 = vld [vmem:[%s214 + $0x48] sm:$0xff]
        %v1678 = vld [vmem:[%s214 + $0x50] sm:$0xff]
        %v1679 = vld [vmem:[%s214 + $0x58] sm:$0xff]
        %v1680 = vld [vmem:[%s214 + $0x60] sm:$0xf]
        %v1683 = vrot.slane %v1665, 7
        %vm1684 = vcmask 1041409
        %v1685 = vsel %vm1684, %v1683, %v1663
        %vm1686 = vcmask 818176
        %v1687 = vsel %vm1686, %v1685, 0
        %vm1689 = vcmask 1043456
        %v1691 = vsel %vm1689, %v1680, 0
        %1693 = vmatpush.msra.mxu0 0.0
        %1694 = vmatpush.msra.mxu0 0.0
        %1695 = vmatpush.msra.mxu0 0.0
        %1696 = vmatpush.msra.mxu0 %v1691
        %1697 = vmatpush.msra.mxu0 %v1679
        %1698 = vmatpush.msra.mxu0 %v1678
        %1699 = vmatpush.msra.mxu0 %v1677
        %1700 = vmatpush.msra.mxu0 %v1676
        %1701 = vmatpush.msra.mxu0 %v1675
        %1702 = vmatpush.msra.mxu0 %v1674
        %1703 = vmatpush.msra.mxu0 %v1673
        %1704 = vmatpush.msra.mxu0 %v1672
        %1705 = vmatpush.msra.mxu0 %v1671
        %1706 = vmatpush.msra.mxu0 %v1670
        %1707 = vmatpush.msra.mxu0 %v1669
        %1708 = vmatpush.msra.mxu0 %v1668
        %1709 = vmatmul.f32.gmra.mxu0 %v1687
        %v1710 = vpop.f32.mrf.mxu0
        %v1711 = vadd.f32 0.0, %v1710
        %1712 = vdwg.mxu0
        %v1713 = vadd.f32 %v1667, %v1711
        %s1714 = scalar_lea.vmem %s214, 104
        %v1715 = vld [vmem:[%s1714] sm:$0xff]
        %v1716 = vld [vmem:[%s1714 + $0x8] sm:$0xff]
        %v1717 = vld [vmem:[%s1714 + $0x10] sm:$0xff]
        %v1718 = vld [vmem:[%s1714 + $0x18] sm:$0xff]
        %v1719 = vld [vmem:[%s1714 + $0x20] sm:$0xff]
        %v1720 = vld [vmem:[%s1714 + $0x28] sm:$0xff]
        %v1721 = vld [vmem:[%s1714 + $0x30] sm:$0xff]
        %v1722 = vld [vmem:[%s1714 + $0x38] sm:$0xff]
        %v1723 = vld [vmem:[%s1714 + $0x40] sm:$0xff]
        %v1724 = vld [vmem:[%s1714 + $0x48] sm:$0xff]
        %v1725 = vld [vmem:[%s1714 + $0x50] sm:$0xff]
        %v1726 = vld [vmem:[%s1714 + $0x58] sm:$0xff]
        %v1727 = vld [vmem:[%s1714 + $0x60] sm:$0xf]
        %v1728 = vrot.slane %v1663, 1
        %v1729 = vsel %vm1684, %v1665, %v1728
        %v1730 = vsel %vm1686, %v1729, 0
        %v1733 = vsel %vm1689, %v1727, 0
        %1735 = vmatpush.msra.mxu0 0.0
        %1736 = vmatpush.msra.mxu0 0.0
        %1737 = vmatpush.msra.mxu0 0.0
        %1738 = vmatpush.msra.mxu0 %v1733
        %1739 = vmatpush.msra.mxu0 %v1726
        %1740 = vmatpush.msra.mxu0 %v1725
        %1741 = vmatpush.msra.mxu0 %v1724
        %1742 = vmatpush.msra.mxu0 %v1723
        %1743 = vmatpush.msra.mxu0 %v1722
        %1744 = vmatpush.msra.mxu0 %v1721
        %1745 = vmatpush.msra.mxu0 %v1720
        %1746 = vmatpush.msra.mxu0 %v1719
        %1747 = vmatpush.msra.mxu0 %v1718
        %1748 = vmatpush.msra.mxu0 %v1717
        %1749 = vmatpush.msra.mxu0 %v1716
        %1750 = vmatpush.msra.mxu0 %v1715
        %1751 = vmatmul.f32.gmra.mxu0 %v1730
        %v1752 = vpop.f32.mrf.mxu0
        %v1753 = vadd.f32 0.0, %v1752
        %1754 = vdwg.mxu0
        %v1755 = vadd.f32 %v1713, %v1753
        %s1756 = scalar_lea.vmem %s214, 208
        %v1757 = vld [vmem:[%s1756] sm:$0xff]
        %v1758 = vld [vmem:[%s1756 + $0x8] sm:$0xff]
        %v1759 = vld [vmem:[%s1756 + $0x10] sm:$0xff]
        %v1760 = vld [vmem:[%s1756 + $0x18] sm:$0xff]
        %v1761 = vld [vmem:[%s1756 + $0x20] sm:$0xff]
        %v1762 = vld [vmem:[%s1756 + $0x28] sm:$0xff]
        %v1763 = vld [vmem:[%s1756 + $0x30] sm:$0xff]
        %v1764 = vld [vmem:[%s1756 + $0x38] sm:$0xff]
        %v1765 = vld [vmem:[%s1756 + $0x40] sm:$0xff]
        %v1766 = vld [vmem:[%s1756 + $0x48] sm:$0xff]
        %v1767 = vld [vmem:[%s1756 + $0x50] sm:$0xff]
        %v1768 = vld [vmem:[%s1756 + $0x58] sm:$0xff]
        %v1769 = vld [vmem:[%s1756 + $0x60] sm:$0xf]
        %v1770 = vrot.slane %v1663, 2
        %v1771 = vrot.slane %v1665, 1
        %v1772 = vsel %vm1684, %v1771, %v1770
        %v1773 = vsel %vm1686, %v1772, 0
        %v1776 = vsel %vm1689, %v1769, 0
        %1778 = vmatpush.msra.mxu0 0.0
        %1779 = vmatpush.msra.mxu0 0.0
        %1780 = vmatpush.msra.mxu0 0.0
        %1781 = vmatpush.msra.mxu0 %v1776
        %1782 = vmatpush.msra.mxu0 %v1768
        %1783 = vmatpush.msra.mxu0 %v1767
        %1784 = vmatpush.msra.mxu0 %v1766
        %1785 = vmatpush.msra.mxu0 %v1765
        %1786 = vmatpush.msra.mxu0 %v1764
        %1787 = vmatpush.msra.mxu0 %v1763
        %1788 = vmatpush.msra.mxu0 %v1762
        %1789 = vmatpush.msra.mxu0 %v1761
        %1790 = vmatpush.msra.mxu0 %v1760
        %1791 = vmatpush.msra.mxu0 %v1759
        %1792 = vmatpush.msra.mxu0 %v1758
        %1793 = vmatpush.msra.mxu0 %v1757
        %1794 = vmatmul.f32.gmra.mxu0 %v1773
        %v1795 = vpop.f32.mrf.mxu0
        %v1796 = vadd.f32 0.0, %v1795
        %1797 = vdwg.mxu0
        %v1798 = vadd.f32 %v1755, %v1796
        %s1799 = scalar_lea.vmem %s214, 312
        %v1800 = vld [vmem:[%s1799] sm:$0xff]
        %v1801 = vld [vmem:[%s1799 + $0x8] sm:$0xff]
        %v1802 = vld [vmem:[%s1799 + $0x10] sm:$0xff]
        %v1803 = vld [vmem:[%s1799 + $0x18] sm:$0xff]
        %v1804 = vld [vmem:[%s1799 + $0x20] sm:$0xff]
        %v1805 = vld [vmem:[%s1799 + $0x28] sm:$0xff]
        %v1806 = vld [vmem:[%s1799 + $0x30] sm:$0xff]
        %v1807 = vld [vmem:[%s1799 + $0x38] sm:$0xff]
        %v1808 = vld [vmem:[%s1799 + $0x40] sm:$0xff]
        %v1809 = vld [vmem:[%s1799 + $0x48] sm:$0xff]
        %v1810 = vld [vmem:[%s1799 + $0x50] sm:$0xff]
        %v1811 = vld [vmem:[%s1799 + $0x58] sm:$0xff]
        %v1812 = vld [vmem:[%s1799 + $0x60] sm:$0xf]
        %v1813 = vrot.slane %v1663, 3
        %v1814 = vrot.slane %v1665, 2
        %v1815 = vsel %vm1684, %v1814, %v1813
        %v1816 = vsel %vm1686, %v1815, 0
        %v1819 = vsel %vm1689, %v1812, 0
        %1821 = vmatpush.msra.mxu0 0.0
        %1822 = vmatpush.msra.mxu0 0.0
        %1823 = vmatpush.msra.mxu0 0.0
        %1824 = vmatpush.msra.mxu0 %v1819
        %1825 = vmatpush.msra.mxu0 %v1811
        %1826 = vmatpush.msra.mxu0 %v1810
        %1827 = vmatpush.msra.mxu0 %v1809
        %1828 = vmatpush.msra.mxu0 %v1808
        %1829 = vmatpush.msra.mxu0 %v1807
        %1830 = vmatpush.msra.mxu0 %v1806
        %1831 = vmatpush.msra.mxu0 %v1805
        %1832 = vmatpush.msra.mxu0 %v1804
        %1833 = vmatpush.msra.mxu0 %v1803
        %1834 = vmatpush.msra.mxu0 %v1802
        %1835 = vmatpush.msra.mxu0 %v1801
        %1836 = vmatpush.msra.mxu0 %v1800
        %1837 = vmatmul.f32.gmra.mxu0 %v1816
        %v1838 = vpop.f32.mrf.mxu0
        %v1839 = vadd.f32 0.0, %v1838
        %1840 = vdwg.mxu0
        %v1841 = vadd.f32 %v1798, %v1839
        %s1842 = scalar_lea.vmem %s214, 416
        %v1843 = vld [vmem:[%s1842] sm:$0xff]
        %v1844 = vld [vmem:[%s1842 + $0x8] sm:$0xff]
        %v1845 = vld [vmem:[%s1842 + $0x10] sm:$0xff]
        %v1846 = vld [vmem:[%s1842 + $0x18] sm:$0xff]
        %v1847 = vld [vmem:[%s1842 + $0x20] sm:$0xff]
        %v1848 = vld [vmem:[%s1842 + $0x28] sm:$0xff]
        %v1849 = vld [vmem:[%s1842 + $0x30] sm:$0xff]
        %v1850 = vld [vmem:[%s1842 + $0x38] sm:$0xff]
        %v1851 = vld [vmem:[%s1842 + $0x40] sm:$0xff]
        %v1852 = vld [vmem:[%s1842 + $0x48] sm:$0xff]
        %v1853 = vld [vmem:[%s1842 + $0x50] sm:$0xff]
        %v1854 = vld [vmem:[%s1842 + $0x58] sm:$0xff]
        %v1855 = vld [vmem:[%s1842 + $0x60] sm:$0xf]
        %v1856 = vrot.slane %v1663, 4
        %v1857 = vrot.slane %v1665, 3
        %v1858 = vsel %vm1684, %v1857, %v1856
        %v1859 = vsel %vm1686, %v1858, 0
        %v1862 = vsel %vm1689, %v1855, 0
        %1864 = vmatpush.msra.mxu0 0.0
        %1865 = vmatpush.msra.mxu0 0.0
        %1866 = vmatpush.msra.mxu0 0.0
        %1867 = vmatpush.msra.mxu0 %v1862
        %1868 = vmatpush.msra.mxu0 %v1854
        %1869 = vmatpush.msra.mxu0 %v1853
        %1870 = vmatpush.msra.mxu0 %v1852
        %1871 = vmatpush.msra.mxu0 %v1851
        %1872 = vmatpush.msra.mxu0 %v1850
        %1873 = vmatpush.msra.mxu0 %v1849
        %1874 = vmatpush.msra.mxu0 %v1848
        %1875 = vmatpush.msra.mxu0 %v1847
        %1876 = vmatpush.msra.mxu0 %v1846
        %1877 = vmatpush.msra.mxu0 %v1845
        %1878 = vmatpush.msra.mxu0 %v1844
        %1879 = vmatpush.msra.mxu0 %v1843
        %1880 = vmatmul.f32.gmra.mxu0 %v1859
        %v1881 = vpop.f32.mrf.mxu0
        %v1882 = vadd.f32 0.0, %v1881
        %1883 = vdwg.mxu0
        %v1884 = vadd.f32 %v1841, %v1882
        %s1885 = scalar_lea.vmem %s214, 520
        %v1886 = vld [vmem:[%s1885] sm:$0xff]
        %v1887 = vld [vmem:[%s1885 + $0x8] sm:$0xff]
        %v1888 = vld [vmem:[%s1885 + $0x10] sm:$0xff]
        %v1889 = vld [vmem:[%s1885 + $0x18] sm:$0xff]
        %v1890 = vld [vmem:[%s1885 + $0x20] sm:$0xff]
        %v1891 = vld [vmem:[%s1885 + $0x28] sm:$0xff]
        %v1892 = vld [vmem:[%s1885 + $0x30] sm:$0xff]
        %v1893 = vld [vmem:[%s1885 + $0x38] sm:$0xff]
        %v1894 = vld [vmem:[%s1885 + $0x40] sm:$0xff]
        %v1895 = vld [vmem:[%s1885 + $0x48] sm:$0xff]
        %v1896 = vld [vmem:[%s1885 + $0x50] sm:$0xff]
        %v1897 = vld [vmem:[%s1885 + $0x58] sm:$0xff]
        %v1898 = vld [vmem:[%s1885 + $0x60] sm:$0xf]
        %v1899 = vrot.slane %v1663, 5
        %v1900 = vrot.slane %v1665, 4
        %v1901 = vsel %vm1684, %v1900, %v1899
        %v1902 = vsel %vm1686, %v1901, 0
        %v1905 = vsel %vm1689, %v1898, 0
        %1907 = vmatpush.msra.mxu0 0.0
        %1908 = vmatpush.msra.mxu0 0.0
        %1909 = vmatpush.msra.mxu0 0.0
        %1910 = vmatpush.msra.mxu0 %v1905
        %1911 = vmatpush.msra.mxu0 %v1897
        %1912 = vmatpush.msra.mxu0 %v1896
        %1913 = vmatpush.msra.mxu0 %v1895
        %1914 = vmatpush.msra.mxu0 %v1894
        %1915 = vmatpush.msra.mxu0 %v1893
        %1916 = vmatpush.msra.mxu0 %v1892
        %1917 = vmatpush.msra.mxu0 %v1891
        %1918 = vmatpush.msra.mxu0 %v1890
        %1919 = vmatpush.msra.mxu0 %v1889
        %1920 = vmatpush.msra.mxu0 %v1888
        %1921 = vmatpush.msra.mxu0 %v1887
        %1922 = vmatpush.msra.mxu0 %v1886
        %1923 = vmatmul.f32.gmra.mxu0 %v1902
        %v1924 = vpop.f32.mrf.mxu0
        %v1925 = vadd.f32 0.0, %v1924
        %1926 = vdwg.mxu0
        %v1927 = vadd.f32 %v1884, %v1925
        %s1928 = scalar_lea.vmem %s214, 624
        %v1929 = vld [vmem:[%s1928] sm:$0xff]
        %v1930 = vld [vmem:[%s1928 + $0x8] sm:$0xff]
        %v1931 = vld [vmem:[%s1928 + $0x10] sm:$0xff]
        %v1932 = vld [vmem:[%s1928 + $0x18] sm:$0xff]
        %v1933 = vld [vmem:[%s1928 + $0x20] sm:$0xff]
        %v1934 = vld [vmem:[%s1928 + $0x28] sm:$0xff]
        %v1935 = vld [vmem:[%s1928 + $0x30] sm:$0xff]
        %v1936 = vld [vmem:[%s1928 + $0x38] sm:$0xff]
        %v1937 = vld [vmem:[%s1928 + $0x40] sm:$0xff]
        %v1938 = vld [vmem:[%s1928 + $0x48] sm:$0xff]
        %v1939 = vld [vmem:[%s1928 + $0x50] sm:$0xff]
        %v1940 = vld [vmem:[%s1928 + $0x58] sm:$0xff]
        %v1941 = vld [vmem:[%s1928 + $0x60] sm:$0xf]
        %v1942 = vrot.slane %v1663, 6
        %v1943 = vrot.slane %v1665, 5
        %v1944 = vsel %vm1684, %v1943, %v1942
        %v1945 = vsel %vm1686, %v1944, 0
        %v1948 = vsel %vm1689, %v1941, 0
        %1950 = vmatpush.msra.mxu0 0.0
        %1951 = vmatpush.msra.mxu0 0.0
        %1952 = vmatpush.msra.mxu0 0.0
        %1953 = vmatpush.msra.mxu0 %v1948
        %1954 = vmatpush.msra.mxu0 %v1940
        %1955 = vmatpush.msra.mxu0 %v1939
        %1956 = vmatpush.msra.mxu0 %v1938
        %1957 = vmatpush.msra.mxu0 %v1937
        %1958 = vmatpush.msra.mxu0 %v1936
        %1959 = vmatpush.msra.mxu0 %v1935
        %1960 = vmatpush.msra.mxu0 %v1934
        %1961 = vmatpush.msra.mxu0 %v1933
        %1962 = vmatpush.msra.mxu0 %v1932
        %1963 = vmatpush.msra.mxu0 %v1931
        %1964 = vmatpush.msra.mxu0 %v1930
        %1965 = vmatpush.msra.mxu0 %v1929
        %1966 = vmatmul.f32.gmra.mxu0 %v1945
        %v1967 = vpop.f32.mrf.mxu0
        %v1968 = vadd.f32 0.0, %v1967
        %1969 = vdwg.mxu0
        %v1970 = vadd.f32 %v1927, %v1968
        %s1971 = scalar_lea.vmem %s214, 728
        %v1972 = vld [vmem:[%s1971] sm:$0xff]
        %v1973 = vld [vmem:[%s1971 + $0x8] sm:$0xff]
        %v1974 = vld [vmem:[%s1971 + $0x10] sm:$0xff]
        %v1975 = vld [vmem:[%s1971 + $0x18] sm:$0xff]
        %v1976 = vld [vmem:[%s1971 + $0x20] sm:$0xff]
        %v1977 = vld [vmem:[%s1971 + $0x28] sm:$0xff]
        %v1978 = vld [vmem:[%s1971 + $0x30] sm:$0xff]
        %v1979 = vld [vmem:[%s1971 + $0x38] sm:$0xff]
        %v1980 = vld [vmem:[%s1971 + $0x40] sm:$0xff]
        %v1981 = vld [vmem:[%s1971 + $0x48] sm:$0xff]
        %v1982 = vld [vmem:[%s1971 + $0x50] sm:$0xff]
        %v1983 = vld [vmem:[%s1971 + $0x58] sm:$0xff]
        %v1984 = vld [vmem:[%s1971 + $0x60] sm:$0xf]
        %v1985 = vrot.slane %v1663, 7
        %v1986 = vrot.slane %v1665, 6
        %v1987 = vsel %vm1684, %v1986, %v1985
        %v1988 = vsel %vm1686, %v1987, 0
        %v1991 = vsel %vm1689, %v1984, 0
        %1993 = vmatpush.msra.mxu0 0.0
        %1994 = vmatpush.msra.mxu0 0.0
        %1995 = vmatpush.msra.mxu0 0.0
        %1996 = vmatpush.msra.mxu0 %v1991
        %1997 = vmatpush.msra.mxu0 %v1983
        %1998 = vmatpush.msra.mxu0 %v1982
        %1999 = vmatpush.msra.mxu0 %v1981
        %2000 = vmatpush.msra.mxu0 %v1980
        %2001 = vmatpush.msra.mxu0 %v1979
        %2002 = vmatpush.msra.mxu0 %v1978
        %2003 = vmatpush.msra.mxu0 %v1977
        %2004 = vmatpush.msra.mxu0 %v1976
        %2005 = vmatpush.msra.mxu0 %v1975
        %2006 = vmatpush.msra.mxu0 %v1974
        %2007 = vmatpush.msra.mxu0 %v1973
        %2008 = vmatpush.msra.mxu0 %v1972
        %2009 = vmatmul.f32.gmra.mxu0 %v1988
        %v2010 = vpop.f32.mrf.mxu0
        %v2011 = vadd.f32 0.0, %v2010
        %2012 = vdwg.mxu0
        %v2013 = vadd.f32 %v1970, %v2011
        %s2014 = scalar_lea.vmem %s214, 832
        %v2015 = vld [vmem:[%s2014] sm:$0xff]
        %v2016 = vld [vmem:[%s2014 + $0x8] sm:$0xff]
        %v2017 = vld [vmem:[%s2014 + $0x10] sm:$0xff]
        %v2018 = vld [vmem:[%s2014 + $0x18] sm:$0xff]
        %v2019 = vld [vmem:[%s2014 + $0x20] sm:$0xff]
        %v2020 = vld [vmem:[%s2014 + $0x28] sm:$0xff]
        %v2021 = vld [vmem:[%s2014 + $0x30] sm:$0xff]
        %v2022 = vld [vmem:[%s2014 + $0x38] sm:$0xff]
        %v2023 = vld [vmem:[%s2014 + $0x40] sm:$0xff]
        %v2024 = vld [vmem:[%s2014 + $0x48] sm:$0xff]
        %v2025 = vld [vmem:[%s2014 + $0x50] sm:$0xff]
        %v2026 = vld [vmem:[%s2014 + $0x58] sm:$0xff]
        %v2027 = vld [vmem:[%s2014 + $0x60] sm:$0xf]
        %v2030 = vrot.slane %v1666, 7
        %v2031 = vsel %vm1684, %v2030, %v1664
        %v2032 = vsel %vm1686, %v2031, 0
        %v2035 = vsel %vm1689, %v2027, 0
        %2037 = vmatpush.msra.mxu0 0.0
        %2038 = vmatpush.msra.mxu0 0.0
        %2039 = vmatpush.msra.mxu0 0.0
        %2040 = vmatpush.msra.mxu0 %v2035
        %2041 = vmatpush.msra.mxu0 %v2026
        %2042 = vmatpush.msra.mxu0 %v2025
        %2043 = vmatpush.msra.mxu0 %v2024
        %2044 = vmatpush.msra.mxu0 %v2023
        %2045 = vmatpush.msra.mxu0 %v2022
        %2046 = vmatpush.msra.mxu0 %v2021
        %2047 = vmatpush.msra.mxu0 %v2020
        %2048 = vmatpush.msra.mxu0 %v2019
        %2049 = vmatpush.msra.mxu0 %v2018
        %2050 = vmatpush.msra.mxu0 %v2017
        %2051 = vmatpush.msra.mxu0 %v2016
        %2052 = vmatpush.msra.mxu0 %v2015
        %2053 = vmatmul.f32.gmra.mxu0 %v2032
        %v2054 = vpop.f32.mrf.mxu0
        %v2055 = vadd.f32 0.0, %v2054
        %2056 = vdwg.mxu0
        %v2057 = vadd.f32 %v2013, %v2055
        %s2058 = scalar_lea.vmem %s214, 936
        %v2059 = vld [vmem:[%s2058] sm:$0xff]
        %v2060 = vld [vmem:[%s2058 + $0x8] sm:$0xff]
        %v2061 = vld [vmem:[%s2058 + $0x10] sm:$0xff]
        %v2062 = vld [vmem:[%s2058 + $0x18] sm:$0xff]
        %v2063 = vld [vmem:[%s2058 + $0x20] sm:$0xff]
        %v2064 = vld [vmem:[%s2058 + $0x28] sm:$0xff]
        %v2065 = vld [vmem:[%s2058 + $0x30] sm:$0xff]
        %v2066 = vld [vmem:[%s2058 + $0x38] sm:$0xff]
        %v2067 = vld [vmem:[%s2058 + $0x40] sm:$0xff]
        %v2068 = vld [vmem:[%s2058 + $0x48] sm:$0xff]
        %v2069 = vld [vmem:[%s2058 + $0x50] sm:$0xff]
        %v2070 = vld [vmem:[%s2058 + $0x58] sm:$0xff]
        %v2071 = vld [vmem:[%s2058 + $0x60] sm:$0xf]
        %v2072 = vrot.slane %v1664, 1
        %v2073 = vsel %vm1684, %v1666, %v2072
        %v2074 = vsel %vm1686, %v2073, 0
        %v2077 = vsel %vm1689, %v2071, 0
        %2079 = vmatpush.msra.mxu0 0.0
        %2080 = vmatpush.msra.mxu0 0.0
        %2081 = vmatpush.msra.mxu0 0.0
        %2082 = vmatpush.msra.mxu0 %v2077
        %2083 = vmatpush.msra.mxu0 %v2070
        %2084 = vmatpush.msra.mxu0 %v2069
        %2085 = vmatpush.msra.mxu0 %v2068
        %2086 = vmatpush.msra.mxu0 %v2067
        %2087 = vmatpush.msra.mxu0 %v2066
        %2088 = vmatpush.msra.mxu0 %v2065
        %2089 = vmatpush.msra.mxu0 %v2064
        %2090 = vmatpush.msra.mxu0 %v2063
        %2091 = vmatpush.msra.mxu0 %v2062
        %2092 = vmatpush.msra.mxu0 %v2061
        %2093 = vmatpush.msra.mxu0 %v2060
        %2094 = vmatpush.msra.mxu0 %v2059
        %2095 = vmatmul.f32.gmra.mxu0 %v2074
        %v2096 = vpop.f32.mrf.mxu0
        %v2097 = vadd.f32 0.0, %v2096
        %2098 = vdwg.mxu0
        %v2099 = vadd.f32 %v2057, %v2097
        %s2100 = scalar_lea.vmem %s214, 1040
        %v2101 = vld [vmem:[%s2100] sm:$0xff]
        %v2102 = vld [vmem:[%s2100 + $0x8] sm:$0xff]
        %v2103 = vld [vmem:[%s2100 + $0x10] sm:$0xff]
        %v2104 = vld [vmem:[%s2100 + $0x18] sm:$0xff]
        %v2105 = vld [vmem:[%s2100 + $0x20] sm:$0xff]
        %v2106 = vld [vmem:[%s2100 + $0x28] sm:$0xff]
        %v2107 = vld [vmem:[%s2100 + $0x30] sm:$0xff]
        %v2108 = vld [vmem:[%s2100 + $0x38] sm:$0xff]
        %v2109 = vld [vmem:[%s2100 + $0x40] sm:$0xff]
        %v2110 = vld [vmem:[%s2100 + $0x48] sm:$0xff]
        %v2111 = vld [vmem:[%s2100 + $0x50] sm:$0xff]
        %v2112 = vld [vmem:[%s2100 + $0x58] sm:$0xff]
        %v2113 = vld [vmem:[%s2100 + $0x60] sm:$0xf]
        %v2114 = vrot.slane %v1664, 2
        %v2115 = vrot.slane %v1666, 1
        %v2116 = vsel %vm1684, %v2115, %v2114
        %v2117 = vsel %vm1686, %v2116, 0
        %v2120 = vsel %vm1689, %v2113, 0
        %2122 = vmatpush.msra.mxu0 0.0
        %2123 = vmatpush.msra.mxu0 0.0
        %2124 = vmatpush.msra.mxu0 0.0
        %2125 = vmatpush.msra.mxu0 %v2120
        %2126 = vmatpush.msra.mxu0 %v2112
        %2127 = vmatpush.msra.mxu0 %v2111
        %2128 = vmatpush.msra.mxu0 %v2110
        %2129 = vmatpush.msra.mxu0 %v2109
        %2130 = vmatpush.msra.mxu0 %v2108
        %2131 = vmatpush.msra.mxu0 %v2107
        %2132 = vmatpush.msra.mxu0 %v2106
        %2133 = vmatpush.msra.mxu0 %v2105
        %2134 = vmatpush.msra.mxu0 %v2104
        %2135 = vmatpush.msra.mxu0 %v2103
        %2136 = vmatpush.msra.mxu0 %v2102
        %2137 = vmatpush.msra.mxu0 %v2101
        %2138 = vmatmul.f32.gmra.mxu0 %v2117
        %v2139 = vpop.f32.mrf.mxu0
        %v2140 = vadd.f32 0.0, %v2139
        %2141 = vdwg.mxu0
        %v2142 = vadd.f32 %v2099, %v2140
        %s2143 = scalar_lea.vmem %s214, 1144
        %v2144 = vld [vmem:[%s2143] sm:$0xff]
        %v2145 = vld [vmem:[%s2143 + $0x8] sm:$0xff]
        %v2146 = vld [vmem:[%s2143 + $0x10] sm:$0xff]
        %v2147 = vld [vmem:[%s2143 + $0x18] sm:$0xff]
        %v2148 = vld [vmem:[%s2143 + $0x20] sm:$0xff]
        %v2149 = vld [vmem:[%s2143 + $0x28] sm:$0xff]
        %v2150 = vld [vmem:[%s2143 + $0x30] sm:$0xff]
        %v2151 = vld [vmem:[%s2143 + $0x38] sm:$0xff]
        %v2152 = vld [vmem:[%s2143 + $0x40] sm:$0xff]
        %v2153 = vld [vmem:[%s2143 + $0x48] sm:$0xff]
        %v2154 = vld [vmem:[%s2143 + $0x50] sm:$0xff]
        %v2155 = vld [vmem:[%s2143 + $0x58] sm:$0xff]
        %v2156 = vld [vmem:[%s2143 + $0x60] sm:$0xf]
        %v2157 = vrot.slane %v1664, 3
        %v2158 = vrot.slane %v1666, 2
        %v2159 = vsel %vm1684, %v2158, %v2157
        %v2160 = vsel %vm1686, %v2159, 0
        %v2163 = vsel %vm1689, %v2156, 0
        %2165 = vmatpush.msra.mxu0 0.0
        %2166 = vmatpush.msra.mxu0 0.0
        %2167 = vmatpush.msra.mxu0 0.0
        %2168 = vmatpush.msra.mxu0 %v2163
        %2169 = vmatpush.msra.mxu0 %v2155
        %2170 = vmatpush.msra.mxu0 %v2154
        %2171 = vmatpush.msra.mxu0 %v2153
        %2172 = vmatpush.msra.mxu0 %v2152
        %2173 = vmatpush.msra.mxu0 %v2151
        %2174 = vmatpush.msra.mxu0 %v2150
        %2175 = vmatpush.msra.mxu0 %v2149
        %2176 = vmatpush.msra.mxu0 %v2148
        %2177 = vmatpush.msra.mxu0 %v2147
        %2178 = vmatpush.msra.mxu0 %v2146
        %2179 = vmatpush.msra.mxu0 %v2145
        %2180 = vmatpush.msra.mxu0 %v2144
        %2181 = vmatmul.f32.gmra.mxu0 %v2160
        %v2182 = vpop.f32.mrf.mxu0
        %v2183 = vadd.f32 0.0, %v2182
        %2184 = vdwg.mxu0
        %v2185 = vadd.f32 %v2142, %v2183
        %s2186 = scalar_lea.vmem %s214, 1248
        %v2187 = vld [vmem:[%s2186] sm:$0xff]
        %v2188 = vld [vmem:[%s2186 + $0x8] sm:$0xff]
        %v2189 = vld [vmem:[%s2186 + $0x10] sm:$0xff]
        %v2190 = vld [vmem:[%s2186 + $0x18] sm:$0xff]
        %v2191 = vld [vmem:[%s2186 + $0x20] sm:$0xff]
        %v2192 = vld [vmem:[%s2186 + $0x28] sm:$0xff]
        %v2193 = vld [vmem:[%s2186 + $0x30] sm:$0xff]
        %v2194 = vld [vmem:[%s2186 + $0x38] sm:$0xff]
        %v2195 = vld [vmem:[%s2186 + $0x40] sm:$0xff]
        %v2196 = vld [vmem:[%s2186 + $0x48] sm:$0xff]
        %v2197 = vld [vmem:[%s2186 + $0x50] sm:$0xff]
        %v2198 = vld [vmem:[%s2186 + $0x58] sm:$0xff]
        %v2199 = vld [vmem:[%s2186 + $0x60] sm:$0xf]
        %v2200 = vrot.slane %v1664, 4
        %v2201 = vrot.slane %v1666, 3
        %v2202 = vsel %vm1684, %v2201, %v2200
        %v2203 = vsel %vm1686, %v2202, 0
        %v2206 = vsel %vm1689, %v2199, 0
        %2208 = vmatpush.msra.mxu0 0.0
        %2209 = vmatpush.msra.mxu0 0.0
        %2210 = vmatpush.msra.mxu0 0.0
        %2211 = vmatpush.msra.mxu0 %v2206
        %2212 = vmatpush.msra.mxu0 %v2198
        %2213 = vmatpush.msra.mxu0 %v2197
        %2214 = vmatpush.msra.mxu0 %v2196
        %2215 = vmatpush.msra.mxu0 %v2195
        %2216 = vmatpush.msra.mxu0 %v2194
        %2217 = vmatpush.msra.mxu0 %v2193
        %2218 = vmatpush.msra.mxu0 %v2192
        %2219 = vmatpush.msra.mxu0 %v2191
        %2220 = vmatpush.msra.mxu0 %v2190
        %2221 = vmatpush.msra.mxu0 %v2189
        %2222 = vmatpush.msra.mxu0 %v2188
        %2223 = vmatpush.msra.mxu0 %v2187
        %2224 = vmatmul.f32.gmra.mxu0 %v2203
        %v2225 = vpop.f32.mrf.mxu0
        %v2226 = vadd.f32 0.0, %v2225
        %2227 = vdwg.mxu0
        %v2228 = vadd.f32 %v2185, %v2226
        %s2229 = scalar_lea.vmem %s214, 1352
        %v2230 = vld [vmem:[%s2229] sm:$0xff]
        %v2231 = vld [vmem:[%s2229 + $0x8] sm:$0xff]
        %v2232 = vld [vmem:[%s2229 + $0x10] sm:$0xff]
        %v2233 = vld [vmem:[%s2229 + $0x18] sm:$0xff]
        %v2234 = vld [vmem:[%s2229 + $0x20] sm:$0xff]
        %v2235 = vld [vmem:[%s2229 + $0x28] sm:$0xff]
        %v2236 = vld [vmem:[%s2229 + $0x30] sm:$0xff]
        %v2237 = vld [vmem:[%s2229 + $0x38] sm:$0xff]
        %v2238 = vld [vmem:[%s2229 + $0x40] sm:$0xff]
        %v2239 = vld [vmem:[%s2229 + $0x48] sm:$0xff]
        %v2240 = vld [vmem:[%s2229 + $0x50] sm:$0xff]
        %v2241 = vld [vmem:[%s2229 + $0x58] sm:$0xff]
        %v2242 = vld [vmem:[%s2229 + $0x60] sm:$0xf]
        %v2243 = vrot.slane %v1664, 5
        %v2244 = vrot.slane %v1666, 4
        %v2245 = vsel %vm1684, %v2244, %v2243
        %v2246 = vsel %vm1686, %v2245, 0
        %v2249 = vsel %vm1689, %v2242, 0
        %2251 = vmatpush.msra.mxu0 0.0
        %2252 = vmatpush.msra.mxu0 0.0
        %2253 = vmatpush.msra.mxu0 0.0
        %2254 = vmatpush.msra.mxu0 %v2249
        %2255 = vmatpush.msra.mxu0 %v2241
        %2256 = vmatpush.msra.mxu0 %v2240
        %2257 = vmatpush.msra.mxu0 %v2239
        %2258 = vmatpush.msra.mxu0 %v2238
        %2259 = vmatpush.msra.mxu0 %v2237
        %2260 = vmatpush.msra.mxu0 %v2236
        %2261 = vmatpush.msra.mxu0 %v2235
        %2262 = vmatpush.msra.mxu0 %v2234
        %2263 = vmatpush.msra.mxu0 %v2233
        %2264 = vmatpush.msra.mxu0 %v2232
        %2265 = vmatpush.msra.mxu0 %v2231
        %2266 = vmatpush.msra.mxu0 %v2230
        %2267 = vmatmul.f32.gmra.mxu0 %v2246
        %v2268 = vpop.f32.mrf.mxu0
        %v2269 = vadd.f32 0.0, %v2268
        %2270 = vdwg.mxu0
        %v2271 = vadd.f32 %v2228, %v2269
        %s2272 = scalar_lea.vmem %s214, 1456
        %v2273 = vld [vmem:[%s2272] sm:$0xff]
        %v2274 = vld [vmem:[%s2272 + $0x8] sm:$0xff]
        %v2275 = vld [vmem:[%s2272 + $0x10] sm:$0xff]
        %v2276 = vld [vmem:[%s2272 + $0x18] sm:$0xff]
        %v2277 = vld [vmem:[%s2272 + $0x20] sm:$0xff]
        %v2278 = vld [vmem:[%s2272 + $0x28] sm:$0xff]
        %v2279 = vld [vmem:[%s2272 + $0x30] sm:$0xff]
        %v2280 = vld [vmem:[%s2272 + $0x38] sm:$0xff]
        %v2281 = vld [vmem:[%s2272 + $0x40] sm:$0xff]
        %v2282 = vld [vmem:[%s2272 + $0x48] sm:$0xff]
        %v2283 = vld [vmem:[%s2272 + $0x50] sm:$0xff]
        %v2284 = vld [vmem:[%s2272 + $0x58] sm:$0xff]
        %v2285 = vld [vmem:[%s2272 + $0x60] sm:$0xf]
        %v2286 = vrot.slane %v1664, 6
        %v2287 = vrot.slane %v1666, 5
        %v2288 = vsel %vm1684, %v2287, %v2286
        %v2289 = vsel %vm1686, %v2288, 0
        %v2292 = vsel %vm1689, %v2285, 0
        %2294 = vmatpush.msra.mxu0 0.0
        %2295 = vmatpush.msra.mxu0 0.0
        %2296 = vmatpush.msra.mxu0 0.0
        %2297 = vmatpush.msra.mxu0 %v2292
        %2298 = vmatpush.msra.mxu0 %v2284
        %2299 = vmatpush.msra.mxu0 %v2283
        %2300 = vmatpush.msra.mxu0 %v2282
        %2301 = vmatpush.msra.mxu0 %v2281
        %2302 = vmatpush.msra.mxu0 %v2280
        %2303 = vmatpush.msra.mxu0 %v2279
        %2304 = vmatpush.msra.mxu0 %v2278
        %2305 = vmatpush.msra.mxu0 %v2277
        %2306 = vmatpush.msra.mxu0 %v2276
        %2307 = vmatpush.msra.mxu0 %v2275
        %2308 = vmatpush.msra.mxu0 %v2274
        %2309 = vmatpush.msra.mxu0 %v2273
        %2310 = vmatmul.f32.gmra.mxu0 %v2289
        %v2311 = vpop.f32.mrf.mxu0
        %v2312 = vadd.f32 0.0, %v2311
        %2313 = vdwg.mxu0
        %v2314 = vadd.f32 %v2271, %v2312
        %s2315 = scalar_lea.vmem %s214, 1560
        %v2316 = vld [vmem:[%s2315] sm:$0xff]
        %v2317 = vld [vmem:[%s2315 + $0x8] sm:$0xff]
        %v2318 = vld [vmem:[%s2315 + $0x10] sm:$0xff]
        %v2319 = vld [vmem:[%s2315 + $0x18] sm:$0xff]
        %v2320 = vld [vmem:[%s2315 + $0x20] sm:$0xff]
        %v2321 = vld [vmem:[%s2315 + $0x28] sm:$0xff]
        %v2322 = vld [vmem:[%s2315 + $0x30] sm:$0xff]
        %v2323 = vld [vmem:[%s2315 + $0x38] sm:$0xff]
        %v2324 = vld [vmem:[%s2315 + $0x40] sm:$0xff]
        %v2325 = vld [vmem:[%s2315 + $0x48] sm:$0xff]
        %v2326 = vld [vmem:[%s2315 + $0x50] sm:$0xff]
        %v2327 = vld [vmem:[%s2315 + $0x58] sm:$0xff]
        %v2328 = vld [vmem:[%s2315 + $0x60] sm:$0xf]
        %v2329 = vrot.slane %v1664, 7
        %v2330 = vrot.slane %v1666, 6
        %v2331 = vsel %vm1684, %v2330, %v2329
        %v2332 = vsel %vm1686, %v2331, 0
        %v2335 = vsel %vm1689, %v2328, 0
        %2337 = vmatpush.msra.mxu0 0.0
        %2338 = vmatpush.msra.mxu0 0.0
        %2339 = vmatpush.msra.mxu0 0.0
        %2340 = vmatpush.msra.mxu0 %v2335
        %2341 = vmatpush.msra.mxu0 %v2327
        %2342 = vmatpush.msra.mxu0 %v2326
        %2343 = vmatpush.msra.mxu0 %v2325
        %2344 = vmatpush.msra.mxu0 %v2324
        %2345 = vmatpush.msra.mxu0 %v2323
        %2346 = vmatpush.msra.mxu0 %v2322
        %2347 = vmatpush.msra.mxu0 %v2321
        %2348 = vmatpush.msra.mxu0 %v2320
        %2349 = vmatpush.msra.mxu0 %v2319
        %2350 = vmatpush.msra.mxu0 %v2318
        %2351 = vmatpush.msra.mxu0 %v2317
        %2352 = vmatpush.msra.mxu0 %v2316
        %2353 = vmatmul.f32.gmra.mxu0 %v2332
        %v2354 = vpop.f32.mrf.mxu0
        %v2355 = vadd.f32 0.0, %v2354
        %2356 = vdwg.mxu0
        %v2357 = vadd.f32 %v2314, %v2355
        %2358 = vst [vmem:[#allocation3] sm:$0x3] %v2357
        %p2359 = scmp.eq.s32.totalorder %s17, 3
        // Predicated region
        $region45: #{epsilon_c_forward.1} parent=39 // pred_check
          %p2360 = pneg %p2359
        $region46: #{epsilon_c_forward.1} parent=39 // pred_check_branch
          %2362 = sbr.rel (%p2360) target = $region48
        $region47: #{epsilon_c_forward.1} parent=39 // pred_region
          %v2363 = vld [vmem:[#allocation3] sm:$0x3]
          %v2364 = vmax.f32 %v2363, 0.0
          %2365 = vst [vmem:[#allocation3] sm:$0x3] %v2364
        $region48: #{epsilon_c_forward.1} parent=39 // pred_fallthru
          _
        // Predicated region
        $region49: #{epsilon_c_forward.1} parent=39 // pred_check
          %p2366 = pneg %p140
        $region50: #{epsilon_c_forward.1} parent=39 // pred_check_branch
          %2368 = sbr.rel (%p2366) target = $region52
        $region51: #{epsilon_c_forward.1} parent=39 // pred_region
          %2370 = vsyncadd [#allocation4], 0
          %s2372 = sshll.u32 [#allocation3], 4
          %s2373 = int_to_ptr.vmem [resolvable:$true] %s2372
          %s2374 = sshll.u32 %s5, 4
          %s2375 = int_to_ptr.hbm [resolvable:$true] %s2374
          %2377 = dma.vmem_to_hbm [thread:$0]  %s2373, 32, %s2375, [#allocation4]
        $region52: #{epsilon_c_forward.1} parent=39 // pred_fallthru
          _
        // Predicated region
        $region53: #{epsilon_c_forward.1} parent=39 // pred_check
          %p2378 = pneg %p140
        $region54: #{epsilon_c_forward.1} parent=39 // pred_check_branch
          %2380 = sbr.rel (%p2378) target = $region56
        $region55: #{epsilon_c_forward.1} parent=39 // pred_region
          %2382 = dma.done [#allocation4], 32
        $region56: #{epsilon_c_forward.1} parent=39 // pred_fallthru
          _
      $region40: #{epsilon_c_forward.1} parent=5 // pred_fallthru
        _
      %p2383 = scmp.le.s32.totalorder 2, %s12
      // Predicated region
      $region57: #{epsilon_c_forward.1} parent=5 // pred_check
        %p2384 = pneg %p2383
      $region58: #{epsilon_c_forward.1} parent=5 // pred_check_branch
        %2386 = sbr.rel (%p2384) target = $region60
      $region59: #{epsilon_c_forward.1} parent=5 // pred_region
        %s2387 = ssub.s32 %s12, 2
      $region60: #{epsilon_c_forward.1} parent=5 // pred_fallthru
        _
    $region6: #{epsilon_c_forward.1} parent=1 // loop_footer
      %s16 = sadd.s32 1, %s12
    $region7: #{epsilon_c_forward.1} parent=1 // loop_footer_branch
      %11 = sbr.rel target = $region3
    $region8: #{epsilon_c_forward.1} parent=1 // loop_exit
      _
    %2388 = vsyncpa [#allocation4], 1
    %s2389 = scalar_lea.sflag [#allocation4], 1
    %2390 = vsyncpa %s2389, 1

</llo_original>
